<compile_context>
chip_gen: v7x
topology: tpu7x:2x2x1
jax: 0.10.0
libtpu: 0.0.40
codegen_flags: <defaults>
</compile_context>

<pallas_src>
import functools

import jax
import jax.numpy as jnp
from jax import lax
from jax.experimental import pallas as pl
from jax.experimental.pallas import tpu as pltpu

LANE = 128
SUBLANE = 8
NUM_CLASSES = 2
_DEFAULT_VMEM_CAP = 64 << 20        # conservative: v7x per-TensorCore VMEM


def _round_up(x, m):
    return (x + m - 1) // m * m


def _vmem_capacity_bytes():
    try:
        return int(pltpu.get_tpu_info().vmem_capacity_bytes)
    except Exception:
        return _DEFAULT_VMEM_CAP


def _vmem_limit(need_bytes, cap):
    # Leave headroom for compiler-internal scratch; never ask for more than 48 MiB.
    hard_cap = min(48 << 20, int(cap * 0.75))
    return int(min(hard_cap, max(16 << 20, int(need_bytes * 1.5))))


def _pick_tile(n_pad, target):
    """Largest multiple of 128 that divides n_pad and is <= target (>=128)."""
    best = LANE
    m = LANE
    while m <= min(target, n_pad):
        if n_pad % m == 0:
            best = m
        m += LANE
    return best


def _masked_log_softmax(logits):
    """log_softmax over the class axis with the zero-padded class lanes masked out."""
    lane = lax.broadcasted_iota(jnp.int32, logits.shape, 1)
    z = jnp.where(lane < NUM_CLASSES, logits, jnp.float32(-1e30))
    m = jnp.max(z, axis=1, keepdims=True)
    zs = z - m
    lse = jnp.log(jnp.sum(jnp.exp(zs), axis=1, keepdims=True))
    return zs - lse


# ---------------------------------------------------------------------------
# Fused path: all three layers in one kernel, everything resident in VMEM.
# ---------------------------------------------------------------------------

def _fused_gnn_kernel(a_ref, x_ref, w1_ref, b1_ref, w2_ref, b2_ref, w3_ref, b3_ref,
                      out_ref):
    a = a_ref[...]                                                    # (Np, Np) bf16

    # Layer 1: H1 = relu(A @ (X @ W1) + b1); F.dropout(p=0.5) is identity in eval mode.
    z1 = jnp.dot(x_ref[...], w1_ref[...], preferred_element_type=jnp.float32)
    h1 = jnp.dot(a, z1.astype(jnp.bfloat16), preferred_element_type=jnp.float32)
    h1 = jnp.maximum(h1 + b1_ref[...], 0.0).astype(jnp.bfloat16)

    # Layer 2: H2 = relu(A @ (H1 @ W2) + b2)
    z2 = jnp.dot(h1, w2_ref[...], preferred_element_type=jnp.float32)
    h2 = jnp.dot(a, z2.astype(jnp.bfloat16), preferred_element_type=jnp.float32)
    h2 = jnp.maximum(h2 + b2_ref[...], 0.0).astype(jnp.bfloat16)

    # Layer 3 + masked log_softmax (pad class lanes -> -inf); lane-dense f32 output.
    z3 = jnp.dot(h2, w3_ref[...], preferred_element_type=jnp.float32)
    logits = jnp.dot(a, z3.astype(jnp.bfloat16), preferred_element_type=jnp.float32)
    logits = logits + b3_ref[...]
    out_ref[...] = _masked_log_softmax(logits).astype(out_ref.dtype)


def _gnn_fused(a_p, x_p, w1p, b1p, w2p, b2p, w3p, b3p):
    n_pad = a_p.shape[0]
    vmem_spec = pl.BlockSpec(memory_space=pltpu.MemorySpace.VMEM)

    flops = int(3 * (2 * n_pad * LANE * LANE + 2 * n_pad * n_pad * LANE))
    bytes_accessed = int((a_p.size + x_p.size + w1p.size + w2p.size + w3p.size) * 2
                         + (b1p.size + b2p.size + b3p.size) * 4
                         + n_pad * LANE * 4)
    need = int((a_p.size + x_p.size + w1p.size + w2p.size + w3p.size) * 2
               + (b1p.size + b2p.size + b3p.size) * 4
               + 6 * n_pad * LANE * 4          # live f32 intermediates (loose)
               + n_pad * LANE * 4)             # output
    cap = _vmem_capacity_bytes()

    return pl.pallas_call(
        _fused_gnn_kernel,
        out_shape=jax.ShapeDtypeStruct((n_pad, LANE), jnp.float32),
        in_specs=[vmem_spec] * 8,
        out_specs=vmem_spec,
        compiler_params=pltpu.CompilerParams(vmem_limit_bytes=_vmem_limit(need, cap)),
        cost_estimate=pl.CostEstimate(flops=flops,
                                      transcendentals=int(n_pad * LANE),
                                      bytes_accessed=bytes_accessed),
    )(a_p, x_p, w1p, b1p, w2p, b2p, w3p, b3p)


# ---------------------------------------------------------------------------
# Tiled path: per-layer kernel, row-parallel x K-chunked reduction grid.
# ---------------------------------------------------------------------------

def _project_kernel(x_ref, w_ref, o_ref):
    # Z = X @ W for one row tile (bf16 MXU, f32 accumulate).
    o_ref[...] = jnp.dot(x_ref[...], w_ref[...],
                         preferred_element_type=jnp.float32).astype(o_ref.dtype)


def _project(x_p, w_p, *, tm):
    n_pad, f_pad = x_p.shape
    k_out = w_p.shape[1]
    need = 2 * tm * f_pad * 2 + f_pad * k_out * 2 + 2 * tm * k_out * 2
    cap = _vmem_capacity_bytes()
    return pl.pallas_call(
        _project_kernel,
        out_shape=jax.ShapeDtypeStruct((n_pad, k_out), jnp.bfloat16),
        grid_spec=pltpu.PrefetchScalarGridSpec(
            num_scalar_prefetch=0,
            grid=(n_pad // tm,),
            in_specs=[
                pl.BlockSpec((tm, f_pad), lambda i: (i, 0)),              # X row tile
                pl.BlockSpec(memory_space=pltpu.MemorySpace.VMEM),        # W resident
            ],
            out_specs=pl.BlockSpec((tm, k_out), lambda i: (i, 0)),
        ),
        compiler_params=pltpu.CompilerParams(
            dimension_semantics=("parallel",),
            vmem_limit_bytes=_vmem_limit(need, cap)),
        cost_estimate=pl.CostEstimate(
            flops=int(2 * n_pad * f_pad * k_out),
            transcendentals=0,
            bytes_accessed=int(x_p.size * 2 + w_p.size * 2 + n_pad * k_out * 2)),
    )(x_p, w_p)


def _agg_layer_kernel(a_ref, z_ref, b_ref, *refs, mode, tk):
    """One (row-tile, K-chunk) step of act(A @ Z + b) [+ fused next-layer projection].

    a_ref : (tm, tk)   bf16 streamed A_hat tile
    z_ref : (Np, 128)  bf16 resident projected activations Z = H_prev @ W (single copy)
    b_ref : (1, 128)   f32 resident bias
    wn_ref: (128, 128) bf16 resident next-layer weight     (mode == "relu_project")
    o_ref : (tm, 128)  bf16 Z_next tile, or f32 log-prob tile
    acc   : (tm, 128)  f32 accumulator scratch
    """
    if mode == "relu_project":
        wn_ref, o_ref, acc_ref = refs
    else:
        o_ref, acc_ref = refs
        wn_ref = None

    k = pl.program_id(1)

    @pl.when(k == 0)
    def _():
        acc_ref[...] = jnp.zeros_like(acc_ref)

    start = pl.multiple_of(k * tk, tk)
    acc_ref[...] += jnp.dot(a_ref[...], z_ref[pl.ds(start, tk), :],
                            preferred_element_type=jnp.float32)

    @pl.when(k == pl.num_programs(1) - 1)
    def _():
        h = acc_ref[...] + b_ref[...]
        if mode == "relu_project":
            # ReLU (+ eval-mode dropout = identity), then the next layer's projection
            # Z_next = H @ W_next fused into this epilogue (per-row-tile, no
            # cross-tile dependency) so H never round-trips through HBM.
            h = jnp.maximum(h, 0.0)
            o_ref[...] = jnp.dot(h.astype(jnp.bfloat16), wn_ref[...],
                                 preferred_element_type=jnp.float32).astype(o_ref.dtype)
        else:
            o_ref[...] = _masked_log_softmax(h).astype(o_ref.dtype)


def _agg_layer(a_p, z, b_p, w_next, *, mode, tm, tk, out_dtype):
    n_pad = a_p.shape[0]
    k_out = LANE
    grid = (n_pad // tm, n_pad // tk)
    vmem_full = pl.BlockSpec(memory_space=pltpu.MemorySpace.VMEM)

    in_specs = [
        pl.BlockSpec((tm, tk), lambda i, k: (i, k)),   # streamed A tile (double-buffered)
        vmem_full,                                     # Z resident (single copy)
        vmem_full,                                     # bias resident
    ]
    args = [a_p, z, b_p]
    if mode == "relu_project":
        in_specs.append(vmem_full)                     # W_next resident
        args.append(w_next)

    out_itemsize = jnp.dtype(out_dtype).itemsize
    flops = 2 * n_pad * n_pad * k_out
    if mode == "relu_project":
        flops += 2 * n_pad * k_out * k_out
    transcendentals = n_pad * k_out if mode == "log_softmax" else 0
    bytes_accessed = (a_p.size * 2 + z.size * 2 + b_p.size * 4
                      + (w_next.size * 2 if mode == "relu_project" else 0)
                      + n_pad * k_out * out_itemsize)
    need = (2 * tm * tk * 2                # A tiles (bf16, double-buffered)
            + n_pad * k_out * 2            # Z resident
            + k_out * 4 + k_out * k_out * 2
            + 2 * tm * k_out * out_itemsize
            + tm * k_out * 4)              # acc scratch
    cap = _vmem_capacity_bytes()

    kernel = functools.partial(_agg_layer_kernel, mode=mode, tk=tk)
    return pl.pallas_call(
        kernel,
        out_shape=jax.ShapeDtypeStruct((n_pad, k_out), out_dtype),
        grid_spec=pltpu.PrefetchScalarGridSpec(
            num_scalar_prefetch=0,
            grid=grid,
            in_specs=in_specs,
            out_specs=pl.BlockSpec((tm, k_out), lambda i, k: (i, 0)),
            scratch_shapes=[pltpu.VMEM((tm, k_out), jnp.float32)],
        ),
        compiler_params=pltpu.CompilerParams(
            dimension_semantics=("parallel", "arbitrary"),
            vmem_limit_bytes=_vmem_limit(need, cap)),
        cost_estimate=pl.CostEstimate(flops=int(flops),
                                      transcendentals=int(transcendentals),
                                      bytes_accessed=int(bytes_accessed)),
    )(*args)


# ---------------------------------------------------------------------------
# Padding (hoistable / cacheable for repeated inference) and forward wrapper.
# ---------------------------------------------------------------------------

def pad_params(params):
    """Zero-pad weights/biases to 128-lane width, cast weights to bf16 (cache me)."""
    (w1, b1), (w2, b2), (w3, b3) = params
    f_pad = _round_up(w1.shape[0], LANE)

    def pad_wb(w, b, ki, ko):
        wp = jnp.zeros((ki, ko), jnp.bfloat16).at[:w.shape[0], :w.shape[1]].set(
            w.astype(jnp.bfloat16))
        bp = jnp.zeros((1, ko), jnp.float32).at[:, :b.size].set(
            b.reshape(1, -1).astype(jnp.float32))
        return wp, bp

    w1p, b1p = pad_wb(w1, b1, f_pad, _round_up(w1.shape[1], LANE))
    w2p, b2p = pad_wb(w2, b2, _round_up(w1.shape[1], LANE), _round_up(w2.shape[1], LANE))
    w3p, b3p = pad_wb(w3, b3, _round_up(w2.shape[1], LANE), _round_up(w3.shape[1], LANE))
    return (w1p, b1p, w2p, b2p, w3p, b3p), f_pad


def pad_graph(a_norm, x, f_pad):
    """Zero-pad A_hat / X to (N_pad multiple of 128, 128 lanes), bf16 (cache me)."""
    n = x.shape[0]
    n_pad = _round_up(n, LANE)
    a_p = jnp.zeros((n_pad, n_pad), jnp.bfloat16).at[:n, :n].set(
        a_norm.astype(jnp.bfloat16))
    x_p = jnp.zeros((n_pad, f_pad), jnp.bfloat16).at[:n, :x.shape[1]].set(
        x.astype(jnp.bfloat16))
    return a_p, x_p


def gnn_forward_padded(a_p, x_p, padded_params, *, force_tiled=False, tm=None, tk=None):
    w1p, b1p, w2p, b2p, w3p, b3p = padded_params
    n_pad = a_p.shape[0]
    cap = _vmem_capacity_bytes()

    # Fused single-kernel path whenever A_hat fits comfortably in VMEM
    # (~N_pad <= 2048 even on v7x's 64 MiB per TensorCore).
    if not force_tiled and n_pad * n_pad * 2 <= min(8 << 20, cap // 6):
        return _gnn_fused(a_p, x_p, w1p, b1p, w2p, b2p, w3p, b3p)

    # Tiled fallback: row-parallel x K-chunked reduction grid per layer.
    tm_target = tm if tm is not None else (512 if cap >= (96 << 20) else 256)
    tk_target = tk if tk is not None else 512
    tm = _pick_tile(n_pad, tm_target)
    tk = _pick_tile(n_pad, tk_target)

    z1 = _project(x_p, w1p, tm=tm)                                   # X @ W1
    z2 = _agg_layer(a_p, z1, b1p, w2p, mode="relu_project",
                    tm=tm, tk=tk, out_dtype=jnp.bfloat16)            # relu(A z1+b1) @ W2
    z3 = _agg_layer(a_p, z2, b2p, w3p, mode="relu_project",
                    tm=tm, tk=tk, out_dtype=jnp.bfloat16)            # relu(A z2+b2) @ W3
    return _agg_layer(a_p, z3, b3p, None, mode="log_softmax",
                      tm=tm, tk=tk, out_dtype=jnp.float32)           # log_softmax(A z3+b3)


def gnn_forward(a_norm, x, params, *, force_tiled=False, tm=None, tk=None):
    """3x GCNConv (+ReLU, eval-mode dropout = identity) + log_softmax over 2 classes."""
    n = x.shape[0]
    # NOTE: for repeated inference, call pad_params/pad_graph once and reuse the
    # padded bf16 tensors (the A_hat pad alone is a full N_pad^2 HBM round trip).
    padded, f_pad = pad_params(params)
    a_p, x_p = pad_graph(a_norm, x, f_pad)
    logp = gnn_forward_padded(a_p, x_p, padded, force_tiled=force_tiled, tm=tm, tk=tk)
    return logp[:n, :NUM_CLASSES]


# ---------------------------------------------------------------------------
# Graph / parameter construction and pure-JAX reference.
# ---------------------------------------------------------------------------

def build_norm_adj(edge_index, num_nodes):
    """Dense A_hat = D^{-1/2}(A + I)D^{-1/2}; A[dst, src] = 1 (PyG message direction)."""
    src, dst = edge_index[0], edge_index[1]
    a = jnp.zeros((num_nodes, num_nodes), jnp.float32)
    a = a.at[dst, src].set(1.0)
    a = jnp.maximum(a, jnp.eye(num_nodes, dtype=jnp.float32))
    deg = jnp.sum(a, axis=1)
    dinv = jnp.where(deg > 0, 1.0 / jnp.sqrt(deg), 0.0)
    return a * dinv[:, None] * dinv[None, :]


def glorot(key, shape):
    fan_in, fan_out = shape
    lim = jnp.sqrt(6.0 / (fan_in + fan_out))
    return jax.random.uniform(key, shape, jnp.float32, -lim, lim)


def ref_forward(a, x, params):
    (w1, b1), (w2, b2), (w3, b3) = params
    h = jnp.maximum(a @ (x @ w1) + b1, 0.0)
    h = jnp.maximum(a @ (h @ w2) + b2, 0.0)
    logits = a @ (h @ w3) + b3
    return jax.nn.log_softmax(logits, axis=1)


if __name__ == "__main__":
    num_nodes, num_features = 256, 16

    key = jax.random.PRNGKey(0)
    kx, ke1, ke2, k1, k2, k3 = jax.random.split(key, 6)

    x = jax.random.normal(kx, (num_nodes, num_features), jnp.float32)

    # Random directed graph (~4 edges/node), PyG edge_index layout [2, E] (src; dst).
    num_edges = 4 * num_nodes
    src = jax.random.randint(ke1, (num_edges,), 0, num_nodes, dtype=jnp.int32)
    off = jax.random.randint(ke2, (num_edges,), 1, num_nodes, dtype=jnp.int32)
    dst = (src + off) % num_nodes
    edge_index = jnp.stack([src, dst])
    a_norm = build_norm_adj(edge_index, num_nodes)

    # GCNConv parameters (Glorot weights, zero biases), matching module __init__ shapes.
    w1 = glorot(k1, (num_features, 64)); b1 = jnp.zeros((64,), jnp.float32)
    w2 = glorot(k2, (64, 32));           b2 = jnp.zeros((32,), jnp.float32)
    w3 = glorot(k3, (32, 2));            b3 = jnp.zeros((2,), jnp.float32)
    params = ((w1, b1), (w2, b2), (w3, b3))

    ref = ref_forward(a_norm, x, params)

    # Fused single-kernel path (A_hat resident in VMEM — the common small-graph case).
    out = gnn_forward(a_norm, x, params)
    jax.block_until_ready(out)
    assert out.shape == (num_nodes, NUM_CLASSES)
    assert bool(jnp.allclose(jnp.sum(jnp.exp(out), axis=1), 1.0, atol=1e-3))
    err_fused = float(jnp.max(jnp.abs(out - ref)))
    assert err_fused < 0.25, f"fused path max abs err vs reference = {err_fused}"

    # Tiled fallback path (row-parallel x K-chunked reduction), forced here with small
    # tiles just to exercise the multi-chunk accumulation on the demo graph.
    out_t = gnn_forward(a_norm, x, params, force_tiled=True, tm=128, tk=128)
    jax.block_until_ready(out_t)
    assert out_t.shape == (num_nodes, NUM_CLASSES)
    err_tiled = float(jnp.max(jnp.abs(out_t - ref)))
    assert err_tiled < 0.25, f"tiled path max abs err vs reference = {err_tiled}"

    print("KERNEL_OK")
</pallas_src>

<mosaic_0001>
module attributes {stable_mosaic.version = 11 : i64} {
  func.func @_fused_gnn_kernel(%arg0: memref<256x256xbf16, #tpu.memory_space<vmem>>, %arg1: memref<256x128xbf16, #tpu.memory_space<vmem>>, %arg2: memref<128x128xbf16, #tpu.memory_space<vmem>>, %arg3: memref<1x128xf32, #tpu.memory_space<vmem>>, %arg4: memref<128x128xbf16, #tpu.memory_space<vmem>>, %arg5: memref<1x128xf32, #tpu.memory_space<vmem>>, %arg6: memref<128x128xbf16, #tpu.memory_space<vmem>>, %arg7: memref<1x128xf32, #tpu.memory_space<vmem>>, %arg8: memref<256x128xf32, #tpu.memory_space<vmem>>) attributes {dimension_semantics = [], scalar_prefetch = 0 : i64, scratch_operands = 0 : i64, tpu.core_type = #tpu.core_type<tc>} {
    %c0 = arith.constant 0 : index
    %c0_0 = arith.constant 0 : index
    %0 = vector.load %arg0[%c0, %c0_0] : memref<256x256xbf16, #tpu.memory_space<vmem>>, vector<256x256xbf16>
    %c0_1 = arith.constant 0 : index
    %c0_2 = arith.constant 0 : index
    %1 = vector.load %arg1[%c0_1, %c0_2] : memref<256x128xbf16, #tpu.memory_space<vmem>>, vector<256x128xbf16>
    %c0_3 = arith.constant 0 : index
    %c0_4 = arith.constant 0 : index
    %2 = vector.load %arg2[%c0_3, %c0_4] : memref<128x128xbf16, #tpu.memory_space<vmem>>, vector<128x128xbf16>
    %cst = arith.constant dense<0.000000e+00> : vector<256x128xf32>
    %3 = tpu.matmul %1, %2, %cst {dimension_numbers = #tpu.dot_dimension_numbers<[1], [0], [0], [1], [0, 0, 1, 1], [], []>} : vector<256x128xbf16>, vector<128x128xbf16>, vector<256x128xf32> -> vector<256x128xf32>
    %4 = arith.truncf %3 : vector<256x128xf32> to vector<256x128xbf16>
    %cst_5 = arith.constant dense<0.000000e+00> : vector<256x128xf32>
    %5 = tpu.matmul %0, %4, %cst_5 {dimension_numbers = #tpu.dot_dimension_numbers<[1], [0], [0], [1], [0, 0, 1, 1], [], []>} : vector<256x256xbf16>, vector<256x128xbf16>, vector<256x128xf32> -> vector<256x128xf32>
    %c0_6 = arith.constant 0 : index
    %c0_7 = arith.constant 0 : index
    %6 = vector.load %arg3[%c0_6, %c0_7] : memref<1x128xf32, #tpu.memory_space<vmem>>, vector<1x128xf32>
    %7 = vector.broadcast %6 : vector<1x128xf32> to vector<256x128xf32>
    %8 = arith.addf %5, %7 : vector<256x128xf32>
    %cst_8 = arith.constant 0.000000e+00 : f32
    %9 = vector.broadcast %cst_8 : f32 to vector<256x128xf32>
    %10 = arith.maximumf %8, %9 : vector<256x128xf32>
    %11 = arith.truncf %10 : vector<256x128xf32> to vector<256x128xbf16>
    %c0_9 = arith.constant 0 : index
    %c0_10 = arith.constant 0 : index
    %12 = vector.load %arg4[%c0_9, %c0_10] : memref<128x128xbf16, #tpu.memory_space<vmem>>, vector<128x128xbf16>
    %cst_11 = arith.constant dense<0.000000e+00> : vector<256x128xf32>
    %13 = tpu.matmul %11, %12, %cst_11 {dimension_numbers = #tpu.dot_dimension_numbers<[1], [0], [0], [1], [0, 0, 1, 1], [], []>} : vector<256x128xbf16>, vector<128x128xbf16>, vector<256x128xf32> -> vector<256x128xf32>
    %14 = arith.truncf %13 : vector<256x128xf32> to vector<256x128xbf16>
    %cst_12 = arith.constant dense<0.000000e+00> : vector<256x128xf32>
    %15 = tpu.matmul %0, %14, %cst_12 {dimension_numbers = #tpu.dot_dimension_numbers<[1], [0], [0], [1], [0, 0, 1, 1], [], []>} : vector<256x256xbf16>, vector<256x128xbf16>, vector<256x128xf32> -> vector<256x128xf32>
    %c0_13 = arith.constant 0 : index
    %c0_14 = arith.constant 0 : index
    %16 = vector.load %arg5[%c0_13, %c0_14] : memref<1x128xf32, #tpu.memory_space<vmem>>, vector<1x128xf32>
    %17 = vector.broadcast %16 : vector<1x128xf32> to vector<256x128xf32>
    %18 = arith.addf %15, %17 : vector<256x128xf32>
    %cst_15 = arith.constant 0.000000e+00 : f32
    %19 = vector.broadcast %cst_15 : f32 to vector<256x128xf32>
    %20 = arith.maximumf %18, %19 : vector<256x128xf32>
    %21 = arith.truncf %20 : vector<256x128xf32> to vector<256x128xbf16>
    %c0_16 = arith.constant 0 : index
    %c0_17 = arith.constant 0 : index
    %22 = vector.load %arg6[%c0_16, %c0_17] : memref<128x128xbf16, #tpu.memory_space<vmem>>, vector<128x128xbf16>
    %cst_18 = arith.constant dense<0.000000e+00> : vector<256x128xf32>
    %23 = tpu.matmul %21, %22, %cst_18 {dimension_numbers = #tpu.dot_dimension_numbers<[1], [0], [0], [1], [0, 0, 1, 1], [], []>} : vector<256x128xbf16>, vector<128x128xbf16>, vector<256x128xf32> -> vector<256x128xf32>
    %24 = arith.truncf %23 : vector<256x128xf32> to vector<256x128xbf16>
    %cst_19 = arith.constant dense<0.000000e+00> : vector<256x128xf32>
    %25 = tpu.matmul %0, %24, %cst_19 {dimension_numbers = #tpu.dot_dimension_numbers<[1], [0], [0], [1], [0, 0, 1, 1], [], []>} : vector<256x256xbf16>, vector<256x128xbf16>, vector<256x128xf32> -> vector<256x128xf32>
    %c0_20 = arith.constant 0 : index
    %c0_21 = arith.constant 0 : index
    %26 = vector.load %arg7[%c0_20, %c0_21] : memref<1x128xf32, #tpu.memory_space<vmem>>, vector<1x128xf32>
    %27 = vector.broadcast %26 : vector<1x128xf32> to vector<256x128xf32>
    %28 = arith.addf %25, %27 : vector<256x128xf32>
    %29 = tpu.iota {dimensions = array<i32: 1>} : vector<256x128xi32>
    %c2_i32 = arith.constant 2 : i32
    %30 = vector.broadcast %c2_i32 : i32 to vector<256x128xi32>
    %31 = arith.cmpi slt, %29, %30 : vector<256x128xi32>
    %cst_22 = arith.constant -1.000000e+30 : f32
    %32 = vector.broadcast %cst_22 : f32 to vector<256x128xf32>
    %33 = arith.select %31, %28, %32 : vector<256x128xi1>, vector<256x128xf32>
    %cst_23 = arith.constant dense<0xFF800000> : vector<256xf32>
    %34 = vector.multi_reduction <maximumf>, %33, %cst_23 [1] : vector<256x128xf32> to vector<256xf32>
    %35 = vector.shape_cast %34 : vector<256xf32> to vector<256x1xf32>
    %36 = vector.broadcast %35 : vector<256x1xf32> to vector<256x128xf32>
    %37 = arith.subf %33, %36 : vector<256x128xf32>
    %38 = math.exp %37 : vector<256x128xf32>
    %cst_24 = arith.constant dense<0.000000e+00> : vector<256xf32>
    %39 = vector.multi_reduction <add>, %38, %cst_24 [1] : vector<256x128xf32> to vector<256xf32>
    %40 = vector.shape_cast %39 : vector<256xf32> to vector<256x1xf32>
    %41 = math.log %40 : vector<256x1xf32>
    %42 = vector.broadcast %41 : vector<256x1xf32> to vector<256x128xf32>
    %43 = arith.subf %37, %42 : vector<256x128xf32>
    %c0_25 = arith.constant 0 : index
    %c0_26 = arith.constant 0 : index
    %44 = vector.load %arg8[%c0_25, %c0_26] : memref<256x128xf32, #tpu.memory_space<vmem>>, vector<256x128xf32>
    tpu.vector_store %arg8[%c0_25, %c0_26], %43 {strides = array<i32>} : memref<256x128xf32, #tpu.memory_space<vmem>>, vector<256x128xf32>,
    return
  }
}

</mosaic_0001>

<llo_original>
// kernel: tpu_custom_call.1
$region0: #{tpu_custom_call.1}
  #allocation0 [shape = 'u32[]', space=smem, size = 0x4, offset = 0x4, fixed_abs, tag = 'smem constant byte address 0x4 - core index']
  #allocation1 [shape = 'u32[144,128]{1,0:T(1,128)}', space=vmem, size = 0x12000, scoped, tag = 'internal scratch']
  %s0 = inlined_call_operand.hbm [shape: bf16[256,256], index: 0, kind: input, shape index: {}]
  %s1 = inlined_call_operand.hbm [shape: bf16[256,128], index: 1, kind: input, shape index: {}]
  %s2 = inlined_call_operand.hbm [shape: bf16[128,128], index: 2, kind: input, shape index: {}]
  %s3 = inlined_call_operand.vmem [shape: f32[1,128], index: 3, kind: input, shape index: {}]
  %s4 = inlined_call_operand.hbm [shape: bf16[128,128], index: 4, kind: input, shape index: {}]
  %s5 = inlined_call_operand.vmem [shape: f32[1,128], index: 5, kind: input, shape index: {}]
  %s6 = inlined_call_operand.hbm [shape: bf16[128,128], index: 6, kind: input, shape index: {}]
  %s7 = inlined_call_operand.vmem [shape: f32[1,128], index: 7, kind: input, shape index: {}]
  %s8 = inlined_call_operand.hbm [shape: f32[256,128], index: 8, kind: output, shape index: {}]
  %s9 = sld [smem:[#allocation0]]
  $region62: #{tpu_custom_call.1} parent=0
    _
  %s11 = ssub.s32 1, %s9
  %s12 = scalar_select 0, %s11, %s9
  $region1: #{tpu_custom_call.1} parent=0
    #allocation2 [shape = 'u8[131072]{0}', space=vmem, size = 0x20000, scoped, tag = 'input window, operand 0, single buffered']
    #allocation3 [shape = 's32[1]{0}', space=sflag, size = 0x4, scoped, tag = 'scoped memory for tpu_custom_call.1']
    #allocation4 [shape = 's32[1]{0}', space=sflag, size = 0x4, scoped, tag = 'scoped memory for tpu_custom_call.1']
    #allocation5 [shape = 'u8[65536]{0}', space=vmem, size = 0x10000, scoped, tag = 'input window, operand 1, single buffered']
    #allocation6 [shape = 's32[1]{0}', space=sflag, size = 0x4, scoped, tag = 'scoped memory for tpu_custom_call.1']
    #allocation7 [shape = 'u8[32768]{0}', space=vmem, size = 0x8000, scoped, tag = 'input window, operand 2, single buffered']
    #allocation8 [shape = 'u8[32768]{0}', space=vmem, size = 0x8000, scoped, tag = 'input window, operand 4, single buffered']
    #allocation9 [shape = 's32[1]{0}', space=sflag, size = 0x4, scoped, tag = 'scoped memory for tpu_custom_call.1']
    #allocation10 [shape = 'u8[32768]{0}', space=vmem, size = 0x8000, scoped, tag = 'input window, operand 6, single buffered']
    #allocation11 [shape = 'u8[131072]{0}', space=vmem, size = 0x20000, scoped, tag = 'output window, operand 0, single buffered']
    %13 = vsyncpa [#allocation3], 0
    %14 = vsyncpa [#allocation6], 0
    %15 = vsyncpa [#allocation9], 0
    %16 = vsyncpa [#allocation4], 0
    // Predicated region
    $region2: #{tpu_custom_call.1} parent=1 // pred_check
      _
    $region3: #{tpu_custom_call.1} parent=1 // pred_check_branch
      %18 = sbr.rel (0) target = $region5
    $region4: #{tpu_custom_call.1} parent=1 // pred_region
      %s20 = ssub.s32 4096, 4096
      %21 = vsyncadd [#allocation3], %s20
      %s22 = sshll.u32 [#allocation2], 4
      %s23 = int_to_ptr.vmem [resolvable:$true] %s22
      %28 = dma.hbm_to_vmem [thread:$0]  %s0, 4096, %s23, [#allocation3], 128, 128, 8
    $region5: #{tpu_custom_call.1} parent=1 // pred_fallthru
      _
    // Predicated region
    $region6: #{tpu_custom_call.1} parent=1 // pred_check
      _
    $region7: #{tpu_custom_call.1} parent=1 // pred_check_branch
      %30 = sbr.rel (0) target = $region9
    $region8: #{tpu_custom_call.1} parent=1 // pred_region
      %s32 = ssub.s32 2048, 2048
      %33 = vsyncadd [#allocation6], %s32
      %s34 = sshll.u32 [#allocation5], 4
      %s35 = int_to_ptr.vmem [resolvable:$true] %s34
      %40 = dma.hbm_to_vmem [thread:$0]  %s1, 2048, %s35, [#allocation6], 64, 64, 4
    $region9: #{tpu_custom_call.1} parent=1 // pred_fallthru
      _
    // Predicated region
    $region10: #{tpu_custom_call.1} parent=1 // pred_check
      _
    $region11: #{tpu_custom_call.1} parent=1 // pred_check_branch
      %42 = sbr.rel (0) target = $region13
    $region12: #{tpu_custom_call.1} parent=1 // pred_region
      %s44 = ssub.s32 1024, 1024
      %45 = vsyncadd [#allocation6], %s44
      %s46 = sshll.u32 [#allocation7], 4
      %s47 = int_to_ptr.vmem [resolvable:$true] %s46
      %52 = dma.hbm_to_vmem [thread:$0]  %s2, 1024, %s47, [#allocation6], 64, 64, 4
    $region13: #{tpu_custom_call.1} parent=1 // pred_fallthru
      _
    // Predicated region
    $region14: #{tpu_custom_call.1} parent=1 // pred_check
      _
    $region15: #{tpu_custom_call.1} parent=1 // pred_check_branch
      %54 = sbr.rel (0) target = $region17
    $region16: #{tpu_custom_call.1} parent=1 // pred_region
      _
    $region17: #{tpu_custom_call.1} parent=1 // pred_fallthru
      _
    // Predicated region
    $region18: #{tpu_custom_call.1} parent=1 // pred_check
      _
    $region19: #{tpu_custom_call.1} parent=1 // pred_check_branch
      %56 = sbr.rel (0) target = $region21
    $region20: #{tpu_custom_call.1} parent=1 // pred_region
      %s58 = ssub.s32 1024, 1024
      %59 = vsyncadd [#allocation9], %s58
      %s60 = sshll.u32 [#allocation8], 4
      %s61 = int_to_ptr.vmem [resolvable:$true] %s60
      %66 = dma.hbm_to_vmem [thread:$0]  %s4, 1024, %s61, [#allocation9], 64, 64, 4
    $region21: #{tpu_custom_call.1} parent=1 // pred_fallthru
      _
    // Predicated region
    $region22: #{tpu_custom_call.1} parent=1 // pred_check
      _
    $region23: #{tpu_custom_call.1} parent=1 // pred_check_branch
      %68 = sbr.rel (0) target = $region25
    $region24: #{tpu_custom_call.1} parent=1 // pred_region
      _
    $region25: #{tpu_custom_call.1} parent=1 // pred_fallthru
      _
    // Predicated region
    $region26: #{tpu_custom_call.1} parent=1 // pred_check
      _
    $region27: #{tpu_custom_call.1} parent=1 // pred_check_branch
      %70 = sbr.rel (0) target = $region29
    $region28: #{tpu_custom_call.1} parent=1 // pred_region
      %s72 = ssub.s32 1024, 1024
      %73 = vsyncadd [#allocation9], %s72
      %s74 = sshll.u32 [#allocation10], 4
      %s75 = int_to_ptr.vmem [resolvable:$true] %s74
      %80 = dma.hbm_to_vmem [thread:$0]  %s6, 1024, %s75, [#allocation9], 64, 64, 4
    $region29: #{tpu_custom_call.1} parent=1 // pred_fallthru
      _
    // Predicated region
    $region30: #{tpu_custom_call.1} parent=1 // pred_check
      _
    $region31: #{tpu_custom_call.1} parent=1 // pred_check_branch
      %82 = sbr.rel (0) target = $region33
    $region32: #{tpu_custom_call.1} parent=1 // pred_region
      _
    $region33: #{tpu_custom_call.1} parent=1 // pred_fallthru
      _
    // Predicated region
    $region34: #{tpu_custom_call.1} parent=1 // pred_check
      _
    $region35: #{tpu_custom_call.1} parent=1 // pred_check_branch
      %84 = sbr.rel (0) target = $region37
    $region36: #{tpu_custom_call.1} parent=1 // pred_region
      %85 = dma.done [#allocation3], 4096
    $region37: #{tpu_custom_call.1} parent=1 // pred_fallthru
      _
    // Predicated region
    $region38: #{tpu_custom_call.1} parent=1 // pred_check
      _
    $region39: #{tpu_custom_call.1} parent=1 // pred_check_branch
      %87 = sbr.rel (0) target = $region41
    $region40: #{tpu_custom_call.1} parent=1 // pred_region
      %88 = dma.done [#allocation6], 2048
    $region41: #{tpu_custom_call.1} parent=1 // pred_fallthru
      _
    // Predicated region
    $region42: #{tpu_custom_call.1} parent=1 // pred_check
      _
    $region43: #{tpu_custom_call.1} parent=1 // pred_check_branch
      %90 = sbr.rel (0) target = $region45
    $region44: #{tpu_custom_call.1} parent=1 // pred_region
      %91 = dma.done [#allocation6], 1024
    $region45: #{tpu_custom_call.1} parent=1 // pred_fallthru
      _
    // Predicated region
    $region46: #{tpu_custom_call.1} parent=1 // pred_check
      _
    $region47: #{tpu_custom_call.1} parent=1 // pred_check_branch
      %93 = sbr.rel (0) target = $region49
    $region48: #{tpu_custom_call.1} parent=1 // pred_region
      %94 = dma.done [#allocation9], 1024
    $region49: #{tpu_custom_call.1} parent=1 // pred_fallthru
      _
    // Predicated region
    $region50: #{tpu_custom_call.1} parent=1 // pred_check
      _
    $region51: #{tpu_custom_call.1} parent=1 // pred_check_branch
      %96 = sbr.rel (0) target = $region53
    $region52: #{tpu_custom_call.1} parent=1 // pred_region
      %97 = dma.done [#allocation9], 1024
    $region53: #{tpu_custom_call.1} parent=1 // pred_fallthru
      _
    %v99 = vld [vmem:[#allocation2] sm:$0xff]
    %v100 = vld [vmem:[#allocation2 + $0x8] sm:$0xff]
    %v101 = vld [vmem:[#allocation2 + $0x10] sm:$0xff]
    %v102 = vld [vmem:[#allocation2 + $0x18] sm:$0xff]
    %v103 = vld [vmem:[#allocation2 + $0x20] sm:$0xff]
    %v104 = vld [vmem:[#allocation2 + $0x28] sm:$0xff]
    %v105 = vld [vmem:[#allocation2 + $0x30] sm:$0xff]
    %v106 = vld [vmem:[#allocation2 + $0x38] sm:$0xff]
    %v107 = vld [vmem:[#allocation2 + $0x40] sm:$0xff]
    %v108 = vld [vmem:[#allocation2 + $0x48] sm:$0xff]
    %v109 = vld [vmem:[#allocation2 + $0x50] sm:$0xff]
    %v110 = vld [vmem:[#allocation2 + $0x58] sm:$0xff]
    %v111 = vld [vmem:[#allocation2 + $0x60] sm:$0xff]
    %v112 = vld [vmem:[#allocation2 + $0x68] sm:$0xff]
    %v113 = vld [vmem:[#allocation2 + $0x70] sm:$0xff]
    %v114 = vld [vmem:[#allocation2 + $0x78] sm:$0xff]
    %v115 = vld [vmem:[#allocation2 + $0x80] sm:$0xff]
    %v116 = vld [vmem:[#allocation2 + $0x88] sm:$0xff]
    %v117 = vld [vmem:[#allocation2 + $0x90] sm:$0xff]
    %v118 = vld [vmem:[#allocation2 + $0x98] sm:$0xff]
    %v119 = vld [vmem:[#allocation2 + $0xa0] sm:$0xff]
    %v120 = vld [vmem:[#allocation2 + $0xa8] sm:$0xff]
    %v121 = vld [vmem:[#allocation2 + $0xb0] sm:$0xff]
    %v122 = vld [vmem:[#allocation2 + $0xb8] sm:$0xff]
    %v123 = vld [vmem:[#allocation2 + $0xc0] sm:$0xff]
    %v124 = vld [vmem:[#allocation2 + $0xc8] sm:$0xff]
    %v125 = vld [vmem:[#allocation2 + $0xd0] sm:$0xff]
    %v126 = vld [vmem:[#allocation2 + $0xd8] sm:$0xff]
    %v127 = vld [vmem:[#allocation2 + $0xe0] sm:$0xff]
    %v128 = vld [vmem:[#allocation2 + $0xe8] sm:$0xff]
    %v129 = vld [vmem:[#allocation2 + $0xf0] sm:$0xff]
    %v130 = vld [vmem:[#allocation2 + $0xf8] sm:$0xff]
    %v131 = vld [vmem:[#allocation5] sm:$0xf]
    %v132 = vld [vmem:[#allocation5 + $0x4] sm:$0xf]
    %v133 = vld [vmem:[#allocation5 + $0x8] sm:$0xf]
    %v134 = vld [vmem:[#allocation5 + $0xc] sm:$0xf]
    %v135 = vld [vmem:[#allocation5 + $0x10] sm:$0xf]
    %v136 = vld [vmem:[#allocation5 + $0x14] sm:$0xf]
    %v137 = vld [vmem:[#allocation5 + $0x18] sm:$0xf]
    %v138 = vld [vmem:[#allocation5 + $0x1c] sm:$0xf]
    %v139 = vld [vmem:[#allocation5 + $0x20] sm:$0xf]
    %v140 = vld [vmem:[#allocation5 + $0x24] sm:$0xf]
    %v141 = vld [vmem:[#allocation5 + $0x28] sm:$0xf]
    %v142 = vld [vmem:[#allocation5 + $0x2c] sm:$0xf]
    %v143 = vld [vmem:[#allocation5 + $0x30] sm:$0xf]
    %v144 = vld [vmem:[#allocation5 + $0x34] sm:$0xf]
    %v145 = vld [vmem:[#allocation5 + $0x38] sm:$0xf]
    %v146 = vld [vmem:[#allocation5 + $0x3c] sm:$0xf]
    %v147 = vld [vmem:[#allocation5 + $0x40] sm:$0xf]
    %v148 = vld [vmem:[#allocation5 + $0x44] sm:$0xf]
    %v149 = vld [vmem:[#allocation5 + $0x48] sm:$0xf]
    %v150 = vld [vmem:[#allocation5 + $0x4c] sm:$0xf]
    %v151 = vld [vmem:[#allocation5 + $0x50] sm:$0xf]
    %v152 = vld [vmem:[#allocation5 + $0x54] sm:$0xf]
    %v153 = vld [vmem:[#allocation5 + $0x58] sm:$0xf]
    %v154 = vld [vmem:[#allocation5 + $0x5c] sm:$0xf]
    %v155 = vld [vmem:[#allocation5 + $0x60] sm:$0xf]
    %v156 = vld [vmem:[#allocation5 + $0x64] sm:$0xf]
    %v157 = vld [vmem:[#allocation5 + $0x68] sm:$0xf]
    %v158 = vld [vmem:[#allocation5 + $0x6c] sm:$0xf]
    %v159 = vld [vmem:[#allocation5 + $0x70] sm:$0xf]
    %v160 = vld [vmem:[#allocation5 + $0x74] sm:$0xf]
    %v161 = vld [vmem:[#allocation5 + $0x78] sm:$0xf]
    %v162 = vld [vmem:[#allocation5 + $0x7c] sm:$0xf]
    %v163 = vld [vmem:[#allocation7] sm:$0xf]
    %v164 = vld [vmem:[#allocation7 + $0x4] sm:$0xf]
    %v165 = vld [vmem:[#allocation7 + $0x8] sm:$0xf]
    %v166 = vld [vmem:[#allocation7 + $0xc] sm:$0xf]
    %v167 = vld [vmem:[#allocation7 + $0x10] sm:$0xf]
    %v168 = vld [vmem:[#allocation7 + $0x14] sm:$0xf]
    %v169 = vld [vmem:[#allocation7 + $0x18] sm:$0xf]
    %v170 = vld [vmem:[#allocation7 + $0x1c] sm:$0xf]
    %v171 = vld [vmem:[#allocation7 + $0x20] sm:$0xf]
    %v172 = vld [vmem:[#allocation7 + $0x24] sm:$0xf]
    %v173 = vld [vmem:[#allocation7 + $0x28] sm:$0xf]
    %v174 = vld [vmem:[#allocation7 + $0x2c] sm:$0xf]
    %v175 = vld [vmem:[#allocation7 + $0x30] sm:$0xf]
    %v176 = vld [vmem:[#allocation7 + $0x34] sm:$0xf]
    %v177 = vld [vmem:[#allocation7 + $0x38] sm:$0xf]
    %v178 = vld [vmem:[#allocation7 + $0x3c] sm:$0xf]
    %v211 = vunpack.c.l.b16 %v131
    %v212 = vunpack.c.l.b16 %v132
    %v213 = vunpack.c.l.b16 %v133
    %v214 = vunpack.c.l.b16 %v134
    %v215 = vunpack.c.l.b16 %v135
    %v216 = vunpack.c.l.b16 %v136
    %v217 = vunpack.c.l.b16 %v137
    %v218 = vunpack.c.l.b16 %v138
    %v219 = vunpack.c.l.b16 %v139
    %v220 = vunpack.c.l.b16 %v140
    %v221 = vunpack.c.l.b16 %v141
    %v222 = vunpack.c.l.b16 %v142
    %v223 = vunpack.c.l.b16 %v143
    %v224 = vunpack.c.l.b16 %v144
    %v225 = vunpack.c.l.b16 %v145
    %v226 = vunpack.c.l.b16 %v146
    %v227 = vunpack.c.l.b16 %v147
    %v228 = vunpack.c.l.b16 %v148
    %v229 = vunpack.c.l.b16 %v149
    %v230 = vunpack.c.l.b16 %v150
    %v231 = vunpack.c.l.b16 %v151
    %v232 = vunpack.c.l.b16 %v152
    %v233 = vunpack.c.l.b16 %v153
    %v234 = vunpack.c.l.b16 %v154
    %v235 = vunpack.c.l.b16 %v155
    %v236 = vunpack.c.l.b16 %v156
    %v237 = vunpack.c.l.b16 %v157
    %v238 = vunpack.c.l.b16 %v158
    %v239 = vunpack.c.l.b16 %v159
    %v240 = vunpack.c.l.b16 %v160
    %v241 = vunpack.c.l.b16 %v161
    %v242 = vunpack.c.l.b16 %v162
    %v243 = vpack.c.b16 %v212, %v211
    %v244 = vpack.c.b16 %v214, %v213
    %v245 = vpack.c.b16 %v216, %v215
    %v246 = vpack.c.b16 %v218, %v217
    %v247 = vpack.c.b16 %v220, %v219
    %v248 = vpack.c.b16 %v222, %v221
    %v249 = vpack.c.b16 %v224, %v223
    %v250 = vpack.c.b16 %v226, %v225
    %v251 = vpack.c.b16 %v228, %v227
    %v252 = vpack.c.b16 %v230, %v229
    %v253 = vpack.c.b16 %v232, %v231
    %v254 = vpack.c.b16 %v234, %v233
    %v255 = vpack.c.b16 %v236, %v235
    %v256 = vpack.c.b16 %v238, %v237
    %v257 = vpack.c.b16 %v240, %v239
    %v258 = vpack.c.b16 %v242, %v241
    %v291 = vunpack.c.l.b16 %v163
    %v292 = vunpack.c.l.b16 %v164
    %v293 = vunpack.c.l.b16 %v165
    %v294 = vunpack.c.l.b16 %v166
    %v295 = vunpack.c.l.b16 %v167
    %v296 = vunpack.c.l.b16 %v168
    %v297 = vunpack.c.l.b16 %v169
    %v298 = vunpack.c.l.b16 %v170
    %v299 = vunpack.c.l.b16 %v171
    %v300 = vunpack.c.l.b16 %v172
    %v301 = vunpack.c.l.b16 %v173
    %v302 = vunpack.c.l.b16 %v174
    %v303 = vunpack.c.l.b16 %v175
    %v304 = vunpack.c.l.b16 %v176
    %v305 = vunpack.c.l.b16 %v177
    %v306 = vunpack.c.l.b16 %v178
    %v307 = vpack.c.b16 %v292, %v291
    %v308 = vpack.c.b16 %v294, %v293
    %v309 = vpack.c.b16 %v296, %v295
    %v310 = vpack.c.b16 %v298, %v297
    %v311 = vpack.c.b16 %v300, %v299
    %v312 = vpack.c.b16 %v302, %v301
    %v313 = vpack.c.b16 %v304, %v303
    %v314 = vpack.c.b16 %v306, %v305
    %323 = vmatprep.subr.bf16.mxu0 0
    %324 = vmatpush1.bf16.msra.mxu0 %v307
    %325 = vmatprep.subr.bf16.mxu0 0
    %326 = vmatpush1.bf16.msra.mxu0 %v308
    %327 = vmatprep.subr.bf16.mxu0 0
    %328 = vmatpush1.bf16.msra.mxu0 %v309
    %329 = vmatprep.subr.bf16.mxu0 0
    %330 = vmatpush1.bf16.msra.mxu0 %v310
    %331 = vmatprep.subr.bf16.mxu0 0
    %332 = vmatpush1.bf16.msra.mxu0 %v311
    %333 = vmatprep.subr.bf16.mxu0 0
    %334 = vmatpush1.bf16.msra.mxu0 %v312
    %335 = vmatprep.subr.bf16.mxu0 0
    %336 = vmatpush1.bf16.msra.mxu0 %v313
    %337 = vmatprep.subr.bf16.mxu0 0
    %338 = vmatpush1.bf16.msra.mxu0 %v314
    %339 = vmatprep.subr.bf16.mxu0 0
    %340 = vmatpush1.bf16.msra.mxu0 0
    %341 = vmatprep.subr.bf16.mxu0 0
    %342 = vmatpush1.bf16.msra.mxu0 0
    %343 = vmatprep.subr.bf16.mxu0 0
    %344 = vmatpush1.bf16.msra.mxu0 0
    %345 = vmatprep.subr.bf16.mxu0 0
    %346 = vmatpush1.bf16.msra.mxu0 0
    %347 = vmatprep.subr.bf16.mxu0 0
    %348 = vmatpush1.bf16.msra.mxu0 0
    %349 = vmatprep.subr.bf16.mxu0 0
    %350 = vmatpush1.bf16.msra.mxu0 0
    %351 = vmatprep.subr.bf16.mxu0 0
    %352 = vmatpush1.bf16.msra.mxu0 0
    %353 = vmatprep.subr.bf16.mxu0 0
    %354 = vmatpush1.bf16.msra.mxu0 0
    %355 = vmatprep.mubr.bf16.mxu0 0
    %356 = vmatmul.mubr.bf16.gmra.mrb[0].mxu0 %v243
    %v357 = vpop.f32.mrb[0].mxu0
    %v358 = vadd.f32 0.0, %v357
    %v359 = vpop.f32.mrb[0].mxu0
    %v360 = vpop.f32.mrb[0].mxu0
    %v361 = vadd.f32 0.0, %v360
    %v362 = vpop.f32.mrb[0].mxu0
    %363 = vmatprep.mubr.bf16.mxu0 0
    %364 = vmatmul.mubr.bf16.gmra.mrb[0].mxu0 %v244
    %v365 = vpop.f32.mrb[0].mxu0
    %v366 = vadd.f32 0.0, %v365
    %v367 = vpop.f32.mrb[0].mxu0
    %v368 = vpop.f32.mrb[0].mxu0
    %v369 = vadd.f32 0.0, %v368
    %v370 = vpop.f32.mrb[0].mxu0
    %371 = vmatprep.mubr.bf16.mxu0 0
    %372 = vmatmul.mubr.bf16.gmra.mrb[0].mxu0 %v245
    %v373 = vpop.f32.mrb[0].mxu0
    %v374 = vadd.f32 0.0, %v373
    %v375 = vpop.f32.mrb[0].mxu0
    %v376 = vpop.f32.mrb[0].mxu0
    %v377 = vadd.f32 0.0, %v376
    %v378 = vpop.f32.mrb[0].mxu0
    %379 = vmatprep.mubr.bf16.mxu0 0
    %380 = vmatmul.mubr.bf16.gmra.mrb[0].mxu0 %v246
    %v381 = vpop.f32.mrb[0].mxu0
    %v382 = vadd.f32 0.0, %v381
    %v383 = vpop.f32.mrb[0].mxu0
    %v384 = vpop.f32.mrb[0].mxu0
    %v385 = vadd.f32 0.0, %v384
    %v386 = vpop.f32.mrb[0].mxu0
    %387 = vmatprep.mubr.bf16.mxu0 0
    %388 = vmatmul.mubr.bf16.gmra.mrb[0].mxu0 %v247
    %v389 = vpop.f32.mrb[0].mxu0
    %v390 = vadd.f32 0.0, %v389
    %v391 = vpop.f32.mrb[0].mxu0
    %v392 = vpop.f32.mrb[0].mxu0
    %v393 = vadd.f32 0.0, %v392
    %v394 = vpop.f32.mrb[0].mxu0
    %395 = vmatprep.mubr.bf16.mxu0 0
    %396 = vmatmul.mubr.bf16.gmra.mrb[0].mxu0 %v248
    %v397 = vpop.f32.mrb[0].mxu0
    %v398 = vadd.f32 0.0, %v397
    %v399 = vpop.f32.mrb[0].mxu0
    %v400 = vpop.f32.mrb[0].mxu0
    %v401 = vadd.f32 0.0, %v400
    %v402 = vpop.f32.mrb[0].mxu0
    %403 = vmatprep.mubr.bf16.mxu0 0
    %404 = vmatmul.mubr.bf16.gmra.mrb[0].mxu0 %v249
    %v405 = vpop.f32.mrb[0].mxu0
    %v406 = vadd.f32 0.0, %v405
    %v407 = vpop.f32.mrb[0].mxu0
    %v408 = vpop.f32.mrb[0].mxu0
    %v409 = vadd.f32 0.0, %v408
    %v410 = vpop.f32.mrb[0].mxu0
    %411 = vmatprep.mubr.bf16.mxu0 0
    %412 = vmatmul.mubr.bf16.gmra.mrb[0].mxu0 %v250
    %v413 = vpop.f32.mrb[0].mxu0
    %v414 = vadd.f32 0.0, %v413
    %v415 = vpop.f32.mrb[0].mxu0
    %v416 = vpop.f32.mrb[0].mxu0
    %v417 = vadd.f32 0.0, %v416
    %v418 = vpop.f32.mrb[0].mxu0
    %419 = vmatprep.mubr.bf16.mxu0 0
    %420 = vmatmul.mubr.bf16.gmra.mrb[0].mxu0 %v251
    %v421 = vpop.f32.mrb[0].mxu0
    %v422 = vadd.f32 0.0, %v421
    %v423 = vpop.f32.mrb[0].mxu0
    %v424 = vpop.f32.mrb[0].mxu0
    %v425 = vadd.f32 0.0, %v424
    %v426 = vpop.f32.mrb[0].mxu0
    %427 = vmatprep.mubr.bf16.mxu0 0
    %428 = vmatmul.mubr.bf16.gmra.mrb[0].mxu0 %v252
    %v429 = vpop.f32.mrb[0].mxu0
    %v430 = vadd.f32 0.0, %v429
    %v431 = vpop.f32.mrb[0].mxu0
    %v432 = vpop.f32.mrb[0].mxu0
    %v433 = vadd.f32 0.0, %v432
    %v434 = vpop.f32.mrb[0].mxu0
    %435 = vmatprep.mubr.bf16.mxu0 0
    %436 = vmatmul.mubr.bf16.gmra.mrb[0].mxu0 %v253
    %v437 = vpop.f32.mrb[0].mxu0
    %v438 = vadd.f32 0.0, %v437
    %v439 = vpop.f32.mrb[0].mxu0
    %v440 = vpop.f32.mrb[0].mxu0
    %v441 = vadd.f32 0.0, %v440
    %v442 = vpop.f32.mrb[0].mxu0
    %443 = vmatprep.mubr.bf16.mxu0 0
    %444 = vmatmul.mubr.bf16.gmra.mrb[0].mxu0 %v254
    %v445 = vpop.f32.mrb[0].mxu0
    %v446 = vadd.f32 0.0, %v445
    %v447 = vpop.f32.mrb[0].mxu0
    %v448 = vpop.f32.mrb[0].mxu0
    %v449 = vadd.f32 0.0, %v448
    %v450 = vpop.f32.mrb[0].mxu0
    %451 = vmatprep.mubr.bf16.mxu0 0
    %452 = vmatmul.mubr.bf16.gmra.mrb[0].mxu0 %v255
    %v453 = vpop.f32.mrb[0].mxu0
    %v454 = vadd.f32 0.0, %v453
    %v455 = vpop.f32.mrb[0].mxu0
    %v456 = vpop.f32.mrb[0].mxu0
    %v457 = vadd.f32 0.0, %v456
    %v458 = vpop.f32.mrb[0].mxu0
    %459 = vmatprep.mubr.bf16.mxu0 0
    %460 = vmatmul.mubr.bf16.gmra.mrb[0].mxu0 %v256
    %v461 = vpop.f32.mrb[0].mxu0
    %v462 = vadd.f32 0.0, %v461
    %v463 = vpop.f32.mrb[0].mxu0
    %v464 = vpop.f32.mrb[0].mxu0
    %v465 = vadd.f32 0.0, %v464
    %v466 = vpop.f32.mrb[0].mxu0
    %467 = vmatprep.mubr.bf16.mxu0 0
    %468 = vmatmul.mubr.bf16.gmra.mrb[0].mxu0 %v257
    %v469 = vpop.f32.mrb[0].mxu0
    %v470 = vadd.f32 0.0, %v469
    %v471 = vpop.f32.mrb[0].mxu0
    %v472 = vpop.f32.mrb[0].mxu0
    %v473 = vadd.f32 0.0, %v472
    %v474 = vpop.f32.mrb[0].mxu0
    %475 = vmatprep.mubr.bf16.mxu0 0
    %476 = vmatmul.mubr.bf16.gmra.mrb[0].mxu0 %v258
    %v477 = vpop.f32.mrb[0].mxu0
    %v478 = vadd.f32 0.0, %v477
    %v479 = vpop.f32.mrb[0].mxu0
    %v480 = vpop.f32.mrb[0].mxu0
    %v481 = vadd.f32 0.0, %v480
    %v482 = vpop.f32.mrb[0].mxu0
    %483 = vdwg.mxu0
    %v484 = vpack.c.bf16 %v361, %v358
    %v485 = vpack.c.bf16 %v369, %v366
    %v486 = vpack.c.bf16 %v377, %v374
    %v487 = vpack.c.bf16 %v385, %v382
    %v488 = vpack.c.bf16 %v393, %v390
    %v489 = vpack.c.bf16 %v401, %v398
    %v490 = vpack.c.bf16 %v409, %v406
    %v491 = vpack.c.bf16 %v417, %v414
    %v492 = vpack.c.bf16 %v425, %v422
    %v493 = vpack.c.bf16 %v433, %v430
    %v494 = vpack.c.bf16 %v441, %v438
    %v495 = vpack.c.bf16 %v449, %v446
    %v496 = vpack.c.bf16 %v457, %v454
    %v497 = vpack.c.bf16 %v465, %v462
    %v498 = vpack.c.bf16 %v473, %v470
    %v499 = vpack.c.bf16 %v481, %v478
    %v500 = vld [vmem:[%s3] sm:$0x1]
    %v502 = vlaneseq
    %v503 = vshrl.u32 %v502, 7
    %v504 = vsub.s32 0, %v503
    %v505 = vrot.slane %v500, %v504
    %v539 = vunpack.c.l.b16 %v99
    %v540 = vunpack.c.h.b16 %v99
    %v541 = vunpack.c.l.b16 %v100
    %v542 = vunpack.c.h.b16 %v100
    %v543 = vunpack.c.l.b16 %v101
    %v544 = vunpack.c.h.b16 %v101
    %v545 = vunpack.c.l.b16 %v102
    %v546 = vunpack.c.h.b16 %v102
    %v547 = vunpack.c.l.b16 %v103
    %v548 = vunpack.c.h.b16 %v103
    %v549 = vunpack.c.l.b16 %v104
    %v550 = vunpack.c.h.b16 %v104
    %v551 = vunpack.c.l.b16 %v105
    %v552 = vunpack.c.h.b16 %v105
    %v553 = vunpack.c.l.b16 %v106
    %v554 = vunpack.c.h.b16 %v106
    %v555 = vunpack.c.l.b16 %v107
    %v556 = vunpack.c.h.b16 %v107
    %v557 = vunpack.c.l.b16 %v108
    %v558 = vunpack.c.h.b16 %v108
    %v559 = vunpack.c.l.b16 %v109
    %v560 = vunpack.c.h.b16 %v109
    %v561 = vunpack.c.l.b16 %v110
    %v562 = vunpack.c.h.b16 %v110
    %v563 = vunpack.c.l.b16 %v111
    %v564 = vunpack.c.h.b16 %v111
    %v565 = vunpack.c.l.b16 %v112
    %v566 = vunpack.c.h.b16 %v112
    %v567 = vunpack.c.l.b16 %v113
    %v568 = vunpack.c.h.b16 %v113
    %v569 = vunpack.c.l.b16 %v114
    %v570 = vunpack.c.h.b16 %v114
    %v571 = vunpack.c.l.b16 %v115
    %v572 = vunpack.c.h.b16 %v115
    %v573 = vunpack.c.l.b16 %v116
    %v574 = vunpack.c.h.b16 %v116
    %v575 = vunpack.c.l.b16 %v117
    %v576 = vunpack.c.h.b16 %v117
    %v577 = vunpack.c.l.b16 %v118
    %v578 = vunpack.c.h.b16 %v118
    %v579 = vunpack.c.l.b16 %v119
    %v580 = vunpack.c.h.b16 %v119
    %v581 = vunpack.c.l.b16 %v120
    %v582 = vunpack.c.h.b16 %v120
    %v583 = vunpack.c.l.b16 %v121
    %v584 = vunpack.c.h.b16 %v121
    %v585 = vunpack.c.l.b16 %v122
    %v586 = vunpack.c.h.b16 %v122
    %v587 = vunpack.c.l.b16 %v123
    %v588 = vunpack.c.h.b16 %v123
    %v589 = vunpack.c.l.b16 %v124
    %v590 = vunpack.c.h.b16 %v124
    %v591 = vunpack.c.l.b16 %v125
    %v592 = vunpack.c.h.b16 %v125
    %v593 = vunpack.c.l.b16 %v126
    %v594 = vunpack.c.h.b16 %v126
    %v595 = vunpack.c.l.b16 %v127
    %v596 = vunpack.c.h.b16 %v127
    %v597 = vunpack.c.l.b16 %v128
    %v598 = vunpack.c.h.b16 %v128
    %v599 = vunpack.c.l.b16 %v129
    %v600 = vunpack.c.h.b16 %v129
    %v601 = vunpack.c.l.b16 %v130
    %v602 = vunpack.c.h.b16 %v130
    %v603 = vpack.c.b16 %v541, %v539
    %v604 = vpack.c.b16 %v542, %v540
    %v605 = vpack.c.b16 %v545, %v543
    %v606 = vpack.c.b16 %v546, %v544
    %v607 = vpack.c.b16 %v549, %v547
    %v608 = vpack.c.b16 %v550, %v548
    %v609 = vpack.c.b16 %v553, %v551
    %v610 = vpack.c.b16 %v554, %v552
    %v611 = vpack.c.b16 %v557, %v555
    %v612 = vpack.c.b16 %v558, %v556
    %v613 = vpack.c.b16 %v561, %v559
    %v614 = vpack.c.b16 %v562, %v560
    %v615 = vpack.c.b16 %v565, %v563
    %v616 = vpack.c.b16 %v566, %v564
    %v617 = vpack.c.b16 %v569, %v567
    %v618 = vpack.c.b16 %v570, %v568
    %v619 = vpack.c.b16 %v573, %v571
    %v620 = vpack.c.b16 %v574, %v572
    %v621 = vpack.c.b16 %v577, %v575
    %v622 = vpack.c.b16 %v578, %v576
    %v623 = vpack.c.b16 %v581, %v579
    %v624 = vpack.c.b16 %v582, %v580
    %v625 = vpack.c.b16 %v585, %v583
    %v626 = vpack.c.b16 %v586, %v584
    %v627 = vpack.c.b16 %v589, %v587
    %v628 = vpack.c.b16 %v590, %v588
    %v629 = vpack.c.b16 %v593, %v591
    %v630 = vpack.c.b16 %v594, %v592
    %v631 = vpack.c.b16 %v597, %v595
    %v632 = vpack.c.b16 %v598, %v596
    %v633 = vpack.c.b16 %v601, %v599
    %v634 = vpack.c.b16 %v602, %v600
    %667 = vmatprep.subr.bf16.mxu0 0
    %668 = vmatpush1.bf16.msra.mxu0 %v484
    %669 = vmatprep.subr.bf16.mxu0 0
    %670 = vmatpush1.bf16.msra.mxu0 %v485
    %671 = vmatprep.subr.bf16.mxu0 0
    %672 = vmatpush1.bf16.msra.mxu0 %v486
    %673 = vmatprep.subr.bf16.mxu0 0
    %674 = vmatpush1.bf16.msra.mxu0 %v487
    %675 = vmatprep.subr.bf16.mxu0 0
    %676 = vmatpush1.bf16.msra.mxu0 %v488
    %677 = vmatprep.subr.bf16.mxu0 0
    %678 = vmatpush1.bf16.msra.mxu0 %v489
    %679 = vmatprep.subr.bf16.mxu0 0
    %680 = vmatpush1.bf16.msra.mxu0 %v490
    %681 = vmatprep.subr.bf16.mxu0 0
    %682 = vmatpush1.bf16.msra.mxu0 %v491
    %683 = vmatprep.subr.bf16.mxu0 0
    %684 = vmatpush1.bf16.msra.mxu0 %v492
    %685 = vmatprep.subr.bf16.mxu0 0
    %686 = vmatpush1.bf16.msra.mxu0 %v493
    %687 = vmatprep.subr.bf16.mxu0 0
    %688 = vmatpush1.bf16.msra.mxu0 %v494
    %689 = vmatprep.subr.bf16.mxu0 0
    %690 = vmatpush1.bf16.msra.mxu0 %v495
    %691 = vmatprep.subr.bf16.mxu0 0
    %692 = vmatpush1.bf16.msra.mxu0 %v496
    %693 = vmatprep.subr.bf16.mxu0 0
    %694 = vmatpush1.bf16.msra.mxu0 %v497
    %695 = vmatprep.subr.bf16.mxu0 0
    %696 = vmatpush1.bf16.msra.mxu0 %v498
    %697 = vmatprep.subr.bf16.mxu0 0
    %698 = vmatpush1.bf16.msra.mxu0 %v499
    %699 = vmatprep.mubr.bf16.mxu0 %v604
    %700 = vmatmul.mubr.bf16.gmra.mrb[0].mxu0 %v603
    %v701 = vpop.f32.mrb[0].mxu0
    %v702 = vadd.f32 %v505, %v701
    %v703 = vpop.f32.mrb[0].mxu0
    %v704 = vpop.f32.mrb[0].mxu0
    %v705 = vadd.f32 %v505, %v704
    %v706 = vpop.f32.mrb[0].mxu0
    %707 = vmatprep.mubr.bf16.mxu0 %v606
    %708 = vmatmul.mubr.bf16.gmra.mrb[0].mxu0 %v605
    %v709 = vpop.f32.mrb[0].mxu0
    %v710 = vadd.f32 %v505, %v709
    %v711 = vpop.f32.mrb[0].mxu0
    %v712 = vpop.f32.mrb[0].mxu0
    %v713 = vadd.f32 %v505, %v712
    %v714 = vpop.f32.mrb[0].mxu0
    %715 = vmatprep.mubr.bf16.mxu0 %v608
    %716 = vmatmul.mubr.bf16.gmra.mrb[0].mxu0 %v607
    %v717 = vpop.f32.mrb[0].mxu0
    %v718 = vadd.f32 %v505, %v717
    %v719 = vpop.f32.mrb[0].mxu0
    %v720 = vpop.f32.mrb[0].mxu0
    %v721 = vadd.f32 %v505, %v720
    %v722 = vpop.f32.mrb[0].mxu0
    %723 = vmatprep.mubr.bf16.mxu0 %v610
    %724 = vmatmul.mubr.bf16.gmra.mrb[0].mxu0 %v609
    %v725 = vpop.f32.mrb[0].mxu0
    %v726 = vadd.f32 %v505, %v725
    %v727 = vpop.f32.mrb[0].mxu0
    %v728 = vpop.f32.mrb[0].mxu0
    %v729 = vadd.f32 %v505, %v728
    %v730 = vpop.f32.mrb[0].mxu0
    %731 = vmatprep.mubr.bf16.mxu0 %v612
    %732 = vmatmul.mubr.bf16.gmra.mrb[0].mxu0 %v611
    %v733 = vpop.f32.mrb[0].mxu0
    %v734 = vadd.f32 %v505, %v733
    %v735 = vpop.f32.mrb[0].mxu0
    %v736 = vpop.f32.mrb[0].mxu0
    %v737 = vadd.f32 %v505, %v736
    %v738 = vpop.f32.mrb[0].mxu0
    %739 = vmatprep.mubr.bf16.mxu0 %v614
    %740 = vmatmul.mubr.bf16.gmra.mrb[0].mxu0 %v613
    %v741 = vpop.f32.mrb[0].mxu0
    %v742 = vadd.f32 %v505, %v741
    %v743 = vpop.f32.mrb[0].mxu0
    %v744 = vpop.f32.mrb[0].mxu0
    %v745 = vadd.f32 %v505, %v744
    %v746 = vpop.f32.mrb[0].mxu0
    %747 = vmatprep.mubr.bf16.mxu0 %v616
    %748 = vmatmul.mubr.bf16.gmra.mrb[0].mxu0 %v615
    %v749 = vpop.f32.mrb[0].mxu0
    %v750 = vadd.f32 %v505, %v749
    %v751 = vpop.f32.mrb[0].mxu0
    %v752 = vpop.f32.mrb[0].mxu0
    %v753 = vadd.f32 %v505, %v752
    %v754 = vpop.f32.mrb[0].mxu0
    %755 = vmatprep.mubr.bf16.mxu0 %v618
    %756 = vmatmul.mubr.bf16.gmra.mrb[0].mxu0 %v617
    %v757 = vpop.f32.mrb[0].mxu0
    %v758 = vadd.f32 %v505, %v757
    %v759 = vpop.f32.mrb[0].mxu0
    %v760 = vpop.f32.mrb[0].mxu0
    %v761 = vadd.f32 %v505, %v760
    %v762 = vpop.f32.mrb[0].mxu0
    %763 = vmatprep.mubr.bf16.mxu0 %v620
    %764 = vmatmul.mubr.bf16.gmra.mrb[0].mxu0 %v619
    %v765 = vpop.f32.mrb[0].mxu0
    %v766 = vadd.f32 %v505, %v765
    %v767 = vpop.f32.mrb[0].mxu0
    %v768 = vpop.f32.mrb[0].mxu0
    %v769 = vadd.f32 %v505, %v768
    %v770 = vpop.f32.mrb[0].mxu0
    %771 = vmatprep.mubr.bf16.mxu0 %v622
    %772 = vmatmul.mubr.bf16.gmra.mrb[0].mxu0 %v621
    %v773 = vpop.f32.mrb[0].mxu0
    %v774 = vadd.f32 %v505, %v773
    %v775 = vpop.f32.mrb[0].mxu0
    %v776 = vpop.f32.mrb[0].mxu0
    %v777 = vadd.f32 %v505, %v776
    %v778 = vpop.f32.mrb[0].mxu0
    %779 = vmatprep.mubr.bf16.mxu0 %v624
    %780 = vmatmul.mubr.bf16.gmra.mrb[0].mxu0 %v623
    %v781 = vpop.f32.mrb[0].mxu0
    %v782 = vadd.f32 %v505, %v781
    %v783 = vpop.f32.mrb[0].mxu0
    %v784 = vpop.f32.mrb[0].mxu0
    %v785 = vadd.f32 %v505, %v784
    %v786 = vpop.f32.mrb[0].mxu0
    %787 = vmatprep.mubr.bf16.mxu0 %v626
    %788 = vmatmul.mubr.bf16.gmra.mrb[0].mxu0 %v625
    %v789 = vpop.f32.mrb[0].mxu0
    %v790 = vadd.f32 %v505, %v789
    %v791 = vpop.f32.mrb[0].mxu0
    %v792 = vpop.f32.mrb[0].mxu0
    %v793 = vadd.f32 %v505, %v792
    %v794 = vpop.f32.mrb[0].mxu0
    %795 = vmatprep.mubr.bf16.mxu0 %v628
    %796 = vmatmul.mubr.bf16.gmra.mrb[0].mxu0 %v627
    %v797 = vpop.f32.mrb[0].mxu0
    %v798 = vadd.f32 %v505, %v797
    %v799 = vpop.f32.mrb[0].mxu0
    %v800 = vpop.f32.mrb[0].mxu0
    %v801 = vadd.f32 %v505, %v800
    %v802 = vpop.f32.mrb[0].mxu0
    %803 = vmatprep.mubr.bf16.mxu0 %v630
    %804 = vmatmul.mubr.bf16.gmra.mrb[0].mxu0 %v629
    %v805 = vpop.f32.mrb[0].mxu0
    %v806 = vadd.f32 %v505, %v805
    %v807 = vpop.f32.mrb[0].mxu0
    %v808 = vpop.f32.mrb[0].mxu0
    %v809 = vadd.f32 %v505, %v808
    %v810 = vpop.f32.mrb[0].mxu0
    %811 = vmatprep.mubr.bf16.mxu0 %v632
    %812 = vmatmul.mubr.bf16.gmra.mrb[0].mxu0 %v631
    %v813 = vpop.f32.mrb[0].mxu0
    %v814 = vadd.f32 %v505, %v813
    %v815 = vpop.f32.mrb[0].mxu0
    %v816 = vpop.f32.mrb[0].mxu0
    %v817 = vadd.f32 %v505, %v816
    %v818 = vpop.f32.mrb[0].mxu0
    %819 = vmatprep.mubr.bf16.mxu0 %v634
    %820 = vmatmul.mubr.bf16.gmra.mrb[0].mxu0 %v633
    %v821 = vpop.f32.mrb[0].mxu0
    %v822 = vadd.f32 %v505, %v821
    %v823 = vpop.f32.mrb[0].mxu0
    %v824 = vpop.f32.mrb[0].mxu0
    %v825 = vadd.f32 %v505, %v824
    %v826 = vpop.f32.mrb[0].mxu0
    %827 = vdwg.mxu0
    %v828 = vmax.f32 %v702, 0.0
    %v829 = vmax.f32 %v705, 0.0
    %v830 = vmax.f32 %v710, 0.0
    %v831 = vmax.f32 %v713, 0.0
    %v832 = vmax.f32 %v718, 0.0
    %v833 = vmax.f32 %v721, 0.0
    %v834 = vmax.f32 %v726, 0.0
    %v835 = vmax.f32 %v729, 0.0
    %v836 = vmax.f32 %v734, 0.0
    %v837 = vmax.f32 %v737, 0.0
    %v838 = vmax.f32 %v742, 0.0
    %v839 = vmax.f32 %v745, 0.0
    %v840 = vmax.f32 %v750, 0.0
    %v841 = vmax.f32 %v753, 0.0
    %v842 = vmax.f32 %v758, 0.0
    %v843 = vmax.f32 %v761, 0.0
    %v844 = vmax.f32 %v766, 0.0
    %v845 = vmax.f32 %v769, 0.0
    %v846 = vmax.f32 %v774, 0.0
    %v847 = vmax.f32 %v777, 0.0
    %v848 = vmax.f32 %v782, 0.0
    %v849 = vmax.f32 %v785, 0.0
    %v850 = vmax.f32 %v790, 0.0
    %v851 = vmax.f32 %v793, 0.0
    %v852 = vmax.f32 %v798, 0.0
    %v853 = vmax.f32 %v801, 0.0
    %v854 = vmax.f32 %v806, 0.0
    %v855 = vmax.f32 %v809, 0.0
    %v856 = vmax.f32 %v814, 0.0
    %v857 = vmax.f32 %v817, 0.0
    %v858 = vmax.f32 %v822, 0.0
    %v859 = vmax.f32 %v825, 0.0
    %v860 = vpack.c.bf16 %v829, %v828
    %v861 = vpack.c.bf16 %v831, %v830
    %v862 = vpack.c.bf16 %v833, %v832
    %v863 = vpack.c.bf16 %v835, %v834
    %v864 = vpack.c.bf16 %v837, %v836
    %v865 = vpack.c.bf16 %v839, %v838
    %v866 = vpack.c.bf16 %v841, %v840
    %v867 = vpack.c.bf16 %v843, %v842
    %v868 = vpack.c.bf16 %v845, %v844
    %v869 = vpack.c.bf16 %v847, %v846
    %v870 = vpack.c.bf16 %v849, %v848
    %v871 = vpack.c.bf16 %v851, %v850
    %v872 = vpack.c.bf16 %v853, %v852
    %v873 = vpack.c.bf16 %v855, %v854
    %v874 = vpack.c.bf16 %v857, %v856
    %v875 = vpack.c.bf16 %v859, %v858
    %v876 = vld [vmem:[#allocation8] sm:$0xf]
    %v877 = vld [vmem:[#allocation8 + $0x4] sm:$0xf]
    %v878 = vld [vmem:[#allocation8 + $0x8] sm:$0xf]
    %v879 = vld [vmem:[#allocation8 + $0xc] sm:$0xf]
    %v880 = vld [vmem:[#allocation8 + $0x10] sm:$0xf]
    %v881 = vld [vmem:[#allocation8 + $0x14] sm:$0xf]
    %v882 = vld [vmem:[#allocation8 + $0x18] sm:$0xf]
    %v883 = vld [vmem:[#allocation8 + $0x1c] sm:$0xf]
    %v884 = vld [vmem:[#allocation8 + $0x20] sm:$0xf]
    %v885 = vld [vmem:[#allocation8 + $0x24] sm:$0xf]
    %v886 = vld [vmem:[#allocation8 + $0x28] sm:$0xf]
    %v887 = vld [vmem:[#allocation8 + $0x2c] sm:$0xf]
    %v888 = vld [vmem:[#allocation8 + $0x30] sm:$0xf]
    %v889 = vld [vmem:[#allocation8 + $0x34] sm:$0xf]
    %v890 = vld [vmem:[#allocation8 + $0x38] sm:$0xf]
    %v891 = vld [vmem:[#allocation8 + $0x3c] sm:$0xf]
    %v908 = vunpack.c.l.b16 %v876
    %v909 = vunpack.c.l.b16 %v877
    %v910 = vunpack.c.l.b16 %v878
    %v911 = vunpack.c.l.b16 %v879
    %v912 = vunpack.c.l.b16 %v880
    %v913 = vunpack.c.l.b16 %v881
    %v914 = vunpack.c.l.b16 %v882
    %v915 = vunpack.c.l.b16 %v883
    %v916 = vunpack.c.l.b16 %v884
    %v917 = vunpack.c.l.b16 %v885
    %v918 = vunpack.c.l.b16 %v886
    %v919 = vunpack.c.l.b16 %v887
    %v920 = vunpack.c.l.b16 %v888
    %v921 = vunpack.c.l.b16 %v889
    %v922 = vunpack.c.l.b16 %v890
    %v923 = vunpack.c.l.b16 %v891
    %v924 = vpack.c.b16 %v909, %v908
    %v925 = vpack.c.b16 %v911, %v910
    %v926 = vpack.c.b16 %v913, %v912
    %v927 = vpack.c.b16 %v915, %v914
    %v928 = vpack.c.b16 %v917, %v916
    %v929 = vpack.c.b16 %v919, %v918
    %v930 = vpack.c.b16 %v921, %v920
    %v931 = vpack.c.b16 %v923, %v922
    %940 = vmatprep.subr.bf16.mxu0 0
    %941 = vmatpush1.bf16.msra.mxu0 %v924
    %942 = vmatprep.subr.bf16.mxu0 0
    %943 = vmatpush1.bf16.msra.mxu0 %v925
    %944 = vmatprep.subr.bf16.mxu0 0
    %945 = vmatpush1.bf16.msra.mxu0 %v926
    %946 = vmatprep.subr.bf16.mxu0 0
    %947 = vmatpush1.bf16.msra.mxu0 %v927
    %948 = vmatprep.subr.bf16.mxu0 0
    %949 = vmatpush1.bf16.msra.mxu0 %v928
    %950 = vmatprep.subr.bf16.mxu0 0
    %951 = vmatpush1.bf16.msra.mxu0 %v929
    %952 = vmatprep.subr.bf16.mxu0 0
    %953 = vmatpush1.bf16.msra.mxu0 %v930
    %954 = vmatprep.subr.bf16.mxu0 0
    %955 = vmatpush1.bf16.msra.mxu0 %v931
    %956 = vmatprep.subr.bf16.mxu0 0
    %957 = vmatpush1.bf16.msra.mxu0 0
    %958 = vmatprep.subr.bf16.mxu0 0
    %959 = vmatpush1.bf16.msra.mxu0 0
    %960 = vmatprep.subr.bf16.mxu0 0
    %961 = vmatpush1.bf16.msra.mxu0 0
    %962 = vmatprep.subr.bf16.mxu0 0
    %963 = vmatpush1.bf16.msra.mxu0 0
    %964 = vmatprep.subr.bf16.mxu0 0
    %965 = vmatpush1.bf16.msra.mxu0 0
    %966 = vmatprep.subr.bf16.mxu0 0
    %967 = vmatpush1.bf16.msra.mxu0 0
    %968 = vmatprep.subr.bf16.mxu0 0
    %969 = vmatpush1.bf16.msra.mxu0 0
    %970 = vmatprep.subr.bf16.mxu0 0
    %971 = vmatpush1.bf16.msra.mxu0 0
    %972 = vmatprep.mubr.bf16.mxu0 0
    %973 = vmatmul.mubr.bf16.gmra.mrb[0].mxu0 %v860
    %v974 = vpop.f32.mrb[0].mxu0
    %v975 = vadd.f32 0.0, %v974
    %v976 = vpop.f32.mrb[0].mxu0
    %v977 = vpop.f32.mrb[0].mxu0
    %v978 = vadd.f32 0.0, %v977
    %v979 = vpop.f32.mrb[0].mxu0
    %980 = vmatprep.mubr.bf16.mxu0 0
    %981 = vmatmul.mubr.bf16.gmra.mrb[0].mxu0 %v861
    %v982 = vpop.f32.mrb[0].mxu0
    %v983 = vadd.f32 0.0, %v982
    %v984 = vpop.f32.mrb[0].mxu0
    %v985 = vpop.f32.mrb[0].mxu0
    %v986 = vadd.f32 0.0, %v985
    %v987 = vpop.f32.mrb[0].mxu0
    %988 = vmatprep.mubr.bf16.mxu0 0
    %989 = vmatmul.mubr.bf16.gmra.mrb[0].mxu0 %v862
    %v990 = vpop.f32.mrb[0].mxu0
    %v991 = vadd.f32 0.0, %v990
    %v992 = vpop.f32.mrb[0].mxu0
    %v993 = vpop.f32.mrb[0].mxu0
    %v994 = vadd.f32 0.0, %v993
    %v995 = vpop.f32.mrb[0].mxu0
    %996 = vmatprep.mubr.bf16.mxu0 0
    %997 = vmatmul.mubr.bf16.gmra.mrb[0].mxu0 %v863
    %v998 = vpop.f32.mrb[0].mxu0
    %v999 = vadd.f32 0.0, %v998
    %v1000 = vpop.f32.mrb[0].mxu0
    %v1001 = vpop.f32.mrb[0].mxu0
    %v1002 = vadd.f32 0.0, %v1001
    %v1003 = vpop.f32.mrb[0].mxu0
    %1004 = vmatprep.mubr.bf16.mxu0 0
    %1005 = vmatmul.mubr.bf16.gmra.mrb[0].mxu0 %v864
    %v1006 = vpop.f32.mrb[0].mxu0
    %v1007 = vadd.f32 0.0, %v1006
    %v1008 = vpop.f32.mrb[0].mxu0
    %v1009 = vpop.f32.mrb[0].mxu0
    %v1010 = vadd.f32 0.0, %v1009
    %v1011 = vpop.f32.mrb[0].mxu0
    %1012 = vmatprep.mubr.bf16.mxu0 0
    %1013 = vmatmul.mubr.bf16.gmra.mrb[0].mxu0 %v865
    %v1014 = vpop.f32.mrb[0].mxu0
    %v1015 = vadd.f32 0.0, %v1014
    %v1016 = vpop.f32.mrb[0].mxu0
    %v1017 = vpop.f32.mrb[0].mxu0
    %v1018 = vadd.f32 0.0, %v1017
    %v1019 = vpop.f32.mrb[0].mxu0
    %1020 = vmatprep.mubr.bf16.mxu0 0
    %1021 = vmatmul.mubr.bf16.gmra.mrb[0].mxu0 %v866
    %v1022 = vpop.f32.mrb[0].mxu0
    %v1023 = vadd.f32 0.0, %v1022
    %v1024 = vpop.f32.mrb[0].mxu0
    %v1025 = vpop.f32.mrb[0].mxu0
    %v1026 = vadd.f32 0.0, %v1025
    %v1027 = vpop.f32.mrb[0].mxu0
    %1028 = vmatprep.mubr.bf16.mxu0 0
    %1029 = vmatmul.mubr.bf16.gmra.mrb[0].mxu0 %v867
    %v1030 = vpop.f32.mrb[0].mxu0
    %v1031 = vadd.f32 0.0, %v1030
    %v1032 = vpop.f32.mrb[0].mxu0
    %v1033 = vpop.f32.mrb[0].mxu0
    %v1034 = vadd.f32 0.0, %v1033
    %v1035 = vpop.f32.mrb[0].mxu0
    %1036 = vmatprep.mubr.bf16.mxu0 0
    %1037 = vmatmul.mubr.bf16.gmra.mrb[0].mxu0 %v868
    %v1038 = vpop.f32.mrb[0].mxu0
    %v1039 = vadd.f32 0.0, %v1038
    %v1040 = vpop.f32.mrb[0].mxu0
    %v1041 = vpop.f32.mrb[0].mxu0
    %v1042 = vadd.f32 0.0, %v1041
    %v1043 = vpop.f32.mrb[0].mxu0
    %1044 = vmatprep.mubr.bf16.mxu0 0
    %1045 = vmatmul.mubr.bf16.gmra.mrb[0].mxu0 %v869
    %v1046 = vpop.f32.mrb[0].mxu0
    %v1047 = vadd.f32 0.0, %v1046
    %v1048 = vpop.f32.mrb[0].mxu0
    %v1049 = vpop.f32.mrb[0].mxu0
    %v1050 = vadd.f32 0.0, %v1049
    %v1051 = vpop.f32.mrb[0].mxu0
    %1052 = vmatprep.mubr.bf16.mxu0 0
    %1053 = vmatmul.mubr.bf16.gmra.mrb[0].mxu0 %v870
    %v1054 = vpop.f32.mrb[0].mxu0
    %v1055 = vadd.f32 0.0, %v1054
    %v1056 = vpop.f32.mrb[0].mxu0
    %v1057 = vpop.f32.mrb[0].mxu0
    %v1058 = vadd.f32 0.0, %v1057
    %v1059 = vpop.f32.mrb[0].mxu0
    %1060 = vmatprep.mubr.bf16.mxu0 0
    %1061 = vmatmul.mubr.bf16.gmra.mrb[0].mxu0 %v871
    %v1062 = vpop.f32.mrb[0].mxu0
    %v1063 = vadd.f32 0.0, %v1062
    %v1064 = vpop.f32.mrb[0].mxu0
    %v1065 = vpop.f32.mrb[0].mxu0
    %v1066 = vadd.f32 0.0, %v1065
    %v1067 = vpop.f32.mrb[0].mxu0
    %1068 = vmatprep.mubr.bf16.mxu0 0
    %1069 = vmatmul.mubr.bf16.gmra.mrb[0].mxu0 %v872
    %v1070 = vpop.f32.mrb[0].mxu0
    %v1071 = vadd.f32 0.0, %v1070
    %v1072 = vpop.f32.mrb[0].mxu0
    %v1073 = vpop.f32.mrb[0].mxu0
    %v1074 = vadd.f32 0.0, %v1073
    %v1075 = vpop.f32.mrb[0].mxu0
    %1076 = vmatprep.mubr.bf16.mxu0 0
    %1077 = vmatmul.mubr.bf16.gmra.mrb[0].mxu0 %v873
    %v1078 = vpop.f32.mrb[0].mxu0
    %v1079 = vadd.f32 0.0, %v1078
    %v1080 = vpop.f32.mrb[0].mxu0
    %v1081 = vpop.f32.mrb[0].mxu0
    %v1082 = vadd.f32 0.0, %v1081
    %v1083 = vpop.f32.mrb[0].mxu0
    %1084 = vmatprep.mubr.bf16.mxu0 0
    %1085 = vmatmul.mubr.bf16.gmra.mrb[0].mxu0 %v874
    %v1086 = vpop.f32.mrb[0].mxu0
    %v1087 = vadd.f32 0.0, %v1086
    %v1088 = vpop.f32.mrb[0].mxu0
    %v1089 = vpop.f32.mrb[0].mxu0
    %v1090 = vadd.f32 0.0, %v1089
    %v1091 = vpop.f32.mrb[0].mxu0
    %1092 = vmatprep.mubr.bf16.mxu0 0
    %1093 = vmatmul.mubr.bf16.gmra.mrb[0].mxu0 %v875
    %v1094 = vpop.f32.mrb[0].mxu0
    %v1095 = vadd.f32 0.0, %v1094
    %v1096 = vpop.f32.mrb[0].mxu0
    %v1097 = vpop.f32.mrb[0].mxu0
    %v1098 = vadd.f32 0.0, %v1097
    %v1099 = vpop.f32.mrb[0].mxu0
    %1100 = vdwg.mxu0
    %v1101 = vpack.c.bf16 %v978, %v975
    %v1102 = vpack.c.bf16 %v986, %v983
    %v1103 = vpack.c.bf16 %v994, %v991
    %v1104 = vpack.c.bf16 %v1002, %v999
    %v1105 = vpack.c.bf16 %v1010, %v1007
    %v1106 = vpack.c.bf16 %v1018, %v1015
    %v1107 = vpack.c.bf16 %v1026, %v1023
    %v1108 = vpack.c.bf16 %v1034, %v1031
    %v1109 = vpack.c.bf16 %v1042, %v1039
    %v1110 = vpack.c.bf16 %v1050, %v1047
    %v1111 = vpack.c.bf16 %v1058, %v1055
    %v1112 = vpack.c.bf16 %v1066, %v1063
    %v1113 = vpack.c.bf16 %v1074, %v1071
    %v1114 = vpack.c.bf16 %v1082, %v1079
    %v1115 = vpack.c.bf16 %v1090, %v1087
    %v1116 = vpack.c.bf16 %v1098, %v1095
    %v1117 = vld [vmem:[%s5] sm:$0x1]
    %v1119 = vlaneseq
    %v1120 = vshrl.u32 %v1119, 7
    %v1121 = vsub.s32 0, %v1120
    %v1122 = vrot.slane %v1117, %v1121
    %1124 = vmatprep.subr.bf16.mxu0 0
    %1125 = vmatpush1.bf16.msra.mxu0 %v1101
    %1126 = vmatprep.subr.bf16.mxu0 0
    %1127 = vmatpush1.bf16.msra.mxu0 %v1102
    %1128 = vmatprep.subr.bf16.mxu0 0
    %1129 = vmatpush1.bf16.msra.mxu0 %v1103
    %1130 = vmatprep.subr.bf16.mxu0 0
    %1131 = vmatpush1.bf16.msra.mxu0 %v1104
    %1132 = vmatprep.subr.bf16.mxu0 0
    %1133 = vmatpush1.bf16.msra.mxu0 %v1105
    %1134 = vmatprep.subr.bf16.mxu0 0
    %1135 = vmatpush1.bf16.msra.mxu0 %v1106
    %1136 = vmatprep.subr.bf16.mxu0 0
    %1137 = vmatpush1.bf16.msra.mxu0 %v1107
    %1138 = vmatprep.subr.bf16.mxu0 0
    %1139 = vmatpush1.bf16.msra.mxu0 %v1108
    %1140 = vmatprep.subr.bf16.mxu0 0
    %1141 = vmatpush1.bf16.msra.mxu0 %v1109
    %1142 = vmatprep.subr.bf16.mxu0 0
    %1143 = vmatpush1.bf16.msra.mxu0 %v1110
    %1144 = vmatprep.subr.bf16.mxu0 0
    %1145 = vmatpush1.bf16.msra.mxu0 %v1111
    %1146 = vmatprep.subr.bf16.mxu0 0
    %1147 = vmatpush1.bf16.msra.mxu0 %v1112
    %1148 = vmatprep.subr.bf16.mxu0 0
    %1149 = vmatpush1.bf16.msra.mxu0 %v1113
    %1150 = vmatprep.subr.bf16.mxu0 0
    %1151 = vmatpush1.bf16.msra.mxu0 %v1114
    %1152 = vmatprep.subr.bf16.mxu0 0
    %1153 = vmatpush1.bf16.msra.mxu0 %v1115
    %1154 = vmatprep.subr.bf16.mxu0 0
    %1155 = vmatpush1.bf16.msra.mxu0 %v1116
    %1156 = vmatprep.mubr.bf16.mxu0 %v604
    %1157 = vmatmul.mubr.bf16.gmra.mrb[0].mxu0 %v603
    %v1158 = vpop.f32.mrb[0].mxu0
    %v1159 = vadd.f32 %v1122, %v1158
    %v1160 = vpop.f32.mrb[0].mxu0
    %v1161 = vpop.f32.mrb[0].mxu0
    %v1162 = vadd.f32 %v1122, %v1161
    %v1163 = vpop.f32.mrb[0].mxu0
    %1164 = vmatprep.mubr.bf16.mxu0 %v606
    %1165 = vmatmul.mubr.bf16.gmra.mrb[0].mxu0 %v605
    %v1166 = vpop.f32.mrb[0].mxu0
    %v1167 = vadd.f32 %v1122, %v1166
    %v1168 = vpop.f32.mrb[0].mxu0
    %v1169 = vpop.f32.mrb[0].mxu0
    %v1170 = vadd.f32 %v1122, %v1169
    %v1171 = vpop.f32.mrb[0].mxu0
    %1172 = vmatprep.mubr.bf16.mxu0 %v608
    %1173 = vmatmul.mubr.bf16.gmra.mrb[0].mxu0 %v607
    %v1174 = vpop.f32.mrb[0].mxu0
    %v1175 = vadd.f32 %v1122, %v1174
    %v1176 = vpop.f32.mrb[0].mxu0
    %v1177 = vpop.f32.mrb[0].mxu0
    %v1178 = vadd.f32 %v1122, %v1177
    %v1179 = vpop.f32.mrb[0].mxu0
    %1180 = vmatprep.mubr.bf16.mxu0 %v610
    %1181 = vmatmul.mubr.bf16.gmra.mrb[0].mxu0 %v609
    %v1182 = vpop.f32.mrb[0].mxu0
    %v1183 = vadd.f32 %v1122, %v1182
    %v1184 = vpop.f32.mrb[0].mxu0
    %v1185 = vpop.f32.mrb[0].mxu0
    %v1186 = vadd.f32 %v1122, %v1185
    %v1187 = vpop.f32.mrb[0].mxu0
    %1188 = vmatprep.mubr.bf16.mxu0 %v612
    %1189 = vmatmul.mubr.bf16.gmra.mrb[0].mxu0 %v611
    %v1190 = vpop.f32.mrb[0].mxu0
    %v1191 = vadd.f32 %v1122, %v1190
    %v1192 = vpop.f32.mrb[0].mxu0
    %v1193 = vpop.f32.mrb[0].mxu0
    %v1194 = vadd.f32 %v1122, %v1193
    %v1195 = vpop.f32.mrb[0].mxu0
    %1196 = vmatprep.mubr.bf16.mxu0 %v614
    %1197 = vmatmul.mubr.bf16.gmra.mrb[0].mxu0 %v613
    %v1198 = vpop.f32.mrb[0].mxu0
    %v1199 = vadd.f32 %v1122, %v1198
    %v1200 = vpop.f32.mrb[0].mxu0
    %v1201 = vpop.f32.mrb[0].mxu0
    %v1202 = vadd.f32 %v1122, %v1201
    %v1203 = vpop.f32.mrb[0].mxu0
    %1204 = vmatprep.mubr.bf16.mxu0 %v616
    %1205 = vmatmul.mubr.bf16.gmra.mrb[0].mxu0 %v615
    %v1206 = vpop.f32.mrb[0].mxu0
    %v1207 = vadd.f32 %v1122, %v1206
    %v1208 = vpop.f32.mrb[0].mxu0
    %v1209 = vpop.f32.mrb[0].mxu0
    %v1210 = vadd.f32 %v1122, %v1209
    %v1211 = vpop.f32.mrb[0].mxu0
    %1212 = vmatprep.mubr.bf16.mxu0 %v618
    %1213 = vmatmul.mubr.bf16.gmra.mrb[0].mxu0 %v617
    %v1214 = vpop.f32.mrb[0].mxu0
    %v1215 = vadd.f32 %v1122, %v1214
    %v1216 = vpop.f32.mrb[0].mxu0
    %v1217 = vpop.f32.mrb[0].mxu0
    %v1218 = vadd.f32 %v1122, %v1217
    %v1219 = vpop.f32.mrb[0].mxu0
    %1220 = vmatprep.mubr.bf16.mxu0 %v620
    %1221 = vmatmul.mubr.bf16.gmra.mrb[0].mxu0 %v619
    %v1222 = vpop.f32.mrb[0].mxu0
    %v1223 = vadd.f32 %v1122, %v1222
    %v1224 = vpop.f32.mrb[0].mxu0
    %v1225 = vpop.f32.mrb[0].mxu0
    %v1226 = vadd.f32 %v1122, %v1225
    %v1227 = vpop.f32.mrb[0].mxu0
    %1228 = vmatprep.mubr.bf16.mxu0 %v622
    %1229 = vmatmul.mubr.bf16.gmra.mrb[0].mxu0 %v621
    %v1230 = vpop.f32.mrb[0].mxu0
    %v1231 = vadd.f32 %v1122, %v1230
    %v1232 = vpop.f32.mrb[0].mxu0
    %v1233 = vpop.f32.mrb[0].mxu0
    %v1234 = vadd.f32 %v1122, %v1233
    %v1235 = vpop.f32.mrb[0].mxu0
    %1236 = vmatprep.mubr.bf16.mxu0 %v624
    %1237 = vmatmul.mubr.bf16.gmra.mrb[0].mxu0 %v623
    %v1238 = vpop.f32.mrb[0].mxu0
    %v1239 = vadd.f32 %v1122, %v1238
    %v1240 = vpop.f32.mrb[0].mxu0
    %v1241 = vpop.f32.mrb[0].mxu0
    %v1242 = vadd.f32 %v1122, %v1241
    %v1243 = vpop.f32.mrb[0].mxu0
    %1244 = vmatprep.mubr.bf16.mxu0 %v626
    %1245 = vmatmul.mubr.bf16.gmra.mrb[0].mxu0 %v625
    %v1246 = vpop.f32.mrb[0].mxu0
    %v1247 = vadd.f32 %v1122, %v1246
    %v1248 = vpop.f32.mrb[0].mxu0
    %v1249 = vpop.f32.mrb[0].mxu0
    %v1250 = vadd.f32 %v1122, %v1249
    %v1251 = vpop.f32.mrb[0].mxu0
    %1252 = vmatprep.mubr.bf16.mxu0 %v628
    %1253 = vmatmul.mubr.bf16.gmra.mrb[0].mxu0 %v627
    %v1254 = vpop.f32.mrb[0].mxu0
    %v1255 = vadd.f32 %v1122, %v1254
    %v1256 = vpop.f32.mrb[0].mxu0
    %v1257 = vpop.f32.mrb[0].mxu0
    %v1258 = vadd.f32 %v1122, %v1257
    %v1259 = vpop.f32.mrb[0].mxu0
    %1260 = vmatprep.mubr.bf16.mxu0 %v630
    %1261 = vmatmul.mubr.bf16.gmra.mrb[0].mxu0 %v629
    %v1262 = vpop.f32.mrb[0].mxu0
    %v1263 = vadd.f32 %v1122, %v1262
    %v1264 = vpop.f32.mrb[0].mxu0
    %v1265 = vpop.f32.mrb[0].mxu0
    %v1266 = vadd.f32 %v1122, %v1265
    %v1267 = vpop.f32.mrb[0].mxu0
    %1268 = vmatprep.mubr.bf16.mxu0 %v632
    %1269 = vmatmul.mubr.bf16.gmra.mrb[0].mxu0 %v631
    %v1270 = vpop.f32.mrb[0].mxu0
    %v1271 = vadd.f32 %v1122, %v1270
    %v1272 = vpop.f32.mrb[0].mxu0
    %v1273 = vpop.f32.mrb[0].mxu0
    %v1274 = vadd.f32 %v1122, %v1273
    %v1275 = vpop.f32.mrb[0].mxu0
    %1276 = vmatprep.mubr.bf16.mxu0 %v634
    %1277 = vmatmul.mubr.bf16.gmra.mrb[0].mxu0 %v633
    %v1278 = vpop.f32.mrb[0].mxu0
    %v1279 = vadd.f32 %v1122, %v1278
    %v1280 = vpop.f32.mrb[0].mxu0
    %v1281 = vpop.f32.mrb[0].mxu0
    %v1282 = vadd.f32 %v1122, %v1281
    %v1283 = vpop.f32.mrb[0].mxu0
    %1284 = vdwg.mxu0
    %v1285 = vmax.f32 %v1159, 0.0
    %v1286 = vmax.f32 %v1162, 0.0
    %v1287 = vmax.f32 %v1167, 0.0
    %v1288 = vmax.f32 %v1170, 0.0
    %v1289 = vmax.f32 %v1175, 0.0
    %v1290 = vmax.f32 %v1178, 0.0
    %v1291 = vmax.f32 %v1183, 0.0
    %v1292 = vmax.f32 %v1186, 0.0
    %v1293 = vmax.f32 %v1191, 0.0
    %v1294 = vmax.f32 %v1194, 0.0
    %v1295 = vmax.f32 %v1199, 0.0
    %v1296 = vmax.f32 %v1202, 0.0
    %v1297 = vmax.f32 %v1207, 0.0
    %v1298 = vmax.f32 %v1210, 0.0
    %v1299 = vmax.f32 %v1215, 0.0
    %v1300 = vmax.f32 %v1218, 0.0
    %v1301 = vmax.f32 %v1223, 0.0
    %v1302 = vmax.f32 %v1226, 0.0
    %v1303 = vmax.f32 %v1231, 0.0
    %v1304 = vmax.f32 %v1234, 0.0
    %v1305 = vmax.f32 %v1239, 0.0
    %v1306 = vmax.f32 %v1242, 0.0
    %v1307 = vmax.f32 %v1247, 0.0
    %v1308 = vmax.f32 %v1250, 0.0
    %v1309 = vmax.f32 %v1255, 0.0
    %v1310 = vmax.f32 %v1258, 0.0
    %v1311 = vmax.f32 %v1263, 0.0
    %v1312 = vmax.f32 %v1266, 0.0
    %v1313 = vmax.f32 %v1271, 0.0
    %v1314 = vmax.f32 %v1274, 0.0
    %v1315 = vmax.f32 %v1279, 0.0
    %v1316 = vmax.f32 %v1282, 0.0
    %v1317 = vpack.c.bf16 %v1286, %v1285
    %v1318 = vpack.c.bf16 %v1288, %v1287
    %v1319 = vpack.c.bf16 %v1290, %v1289
    %v1320 = vpack.c.bf16 %v1292, %v1291
    %v1321 = vpack.c.bf16 %v1294, %v1293
    %v1322 = vpack.c.bf16 %v1296, %v1295
    %v1323 = vpack.c.bf16 %v1298, %v1297
    %v1324 = vpack.c.bf16 %v1300, %v1299
    %v1325 = vpack.c.bf16 %v1302, %v1301
    %v1326 = vpack.c.bf16 %v1304, %v1303
    %v1327 = vpack.c.bf16 %v1306, %v1305
    %v1328 = vpack.c.bf16 %v1308, %v1307
    %v1329 = vpack.c.bf16 %v1310, %v1309
    %v1330 = vpack.c.bf16 %v1312, %v1311
    %v1331 = vpack.c.bf16 %v1314, %v1313
    %v1332 = vpack.c.bf16 %v1316, %v1315
    %v1333 = vld [vmem:[#allocation10] sm:$0xf]
    %v1334 = vld [vmem:[#allocation10 + $0x4] sm:$0xf]
    %v1335 = vld [vmem:[#allocation10 + $0x8] sm:$0xf]
    %v1336 = vld [vmem:[#allocation10 + $0xc] sm:$0xf]
    %v1337 = vld [vmem:[#allocation10 + $0x10] sm:$0xf]
    %v1338 = vld [vmem:[#allocation10 + $0x14] sm:$0xf]
    %v1339 = vld [vmem:[#allocation10 + $0x18] sm:$0xf]
    %v1340 = vld [vmem:[#allocation10 + $0x1c] sm:$0xf]
    %v1341 = vld [vmem:[#allocation10 + $0x20] sm:$0xf]
    %v1342 = vld [vmem:[#allocation10 + $0x24] sm:$0xf]
    %v1343 = vld [vmem:[#allocation10 + $0x28] sm:$0xf]
    %v1344 = vld [vmem:[#allocation10 + $0x2c] sm:$0xf]
    %v1345 = vld [vmem:[#allocation10 + $0x30] sm:$0xf]
    %v1346 = vld [vmem:[#allocation10 + $0x34] sm:$0xf]
    %v1347 = vld [vmem:[#allocation10 + $0x38] sm:$0xf]
    %v1348 = vld [vmem:[#allocation10 + $0x3c] sm:$0xf]
    %v1365 = vunpack.c.l.b16 %v1333
    %v1366 = vunpack.c.l.b16 %v1334
    %v1367 = vunpack.c.l.b16 %v1335
    %v1368 = vunpack.c.l.b16 %v1336
    %v1369 = vunpack.c.l.b16 %v1337
    %v1370 = vunpack.c.l.b16 %v1338
    %v1371 = vunpack.c.l.b16 %v1339
    %v1372 = vunpack.c.l.b16 %v1340
    %v1373 = vunpack.c.l.b16 %v1341
    %v1374 = vunpack.c.l.b16 %v1342
    %v1375 = vunpack.c.l.b16 %v1343
    %v1376 = vunpack.c.l.b16 %v1344
    %v1377 = vunpack.c.l.b16 %v1345
    %v1378 = vunpack.c.l.b16 %v1346
    %v1379 = vunpack.c.l.b16 %v1347
    %v1380 = vunpack.c.l.b16 %v1348
    %v1381 = vpack.c.b16 %v1366, %v1365
    %v1382 = vpack.c.b16 %v1368, %v1367
    %v1383 = vpack.c.b16 %v1370, %v1369
    %v1384 = vpack.c.b16 %v1372, %v1371
    %v1385 = vpack.c.b16 %v1374, %v1373
    %v1386 = vpack.c.b16 %v1376, %v1375
    %v1387 = vpack.c.b16 %v1378, %v1377
    %v1388 = vpack.c.b16 %v1380, %v1379
    %1397 = vmatprep.subr.bf16.mxu0 0
    %1398 = vmatpush1.bf16.msra.mxu0 %v1381
    %1399 = vmatprep.subr.bf16.mxu0 0
    %1400 = vmatpush1.bf16.msra.mxu0 %v1382
    %1401 = vmatprep.subr.bf16.mxu0 0
    %1402 = vmatpush1.bf16.msra.mxu0 %v1383
    %1403 = vmatprep.subr.bf16.mxu0 0
    %1404 = vmatpush1.bf16.msra.mxu0 %v1384
    %1405 = vmatprep.subr.bf16.mxu0 0
    %1406 = vmatpush1.bf16.msra.mxu0 %v1385
    %1407 = vmatprep.subr.bf16.mxu0 0
    %1408 = vmatpush1.bf16.msra.mxu0 %v1386
    %1409 = vmatprep.subr.bf16.mxu0 0
    %1410 = vmatpush1.bf16.msra.mxu0 %v1387
    %1411 = vmatprep.subr.bf16.mxu0 0
    %1412 = vmatpush1.bf16.msra.mxu0 %v1388
    %1413 = vmatprep.subr.bf16.mxu0 0
    %1414 = vmatpush1.bf16.msra.mxu0 0
    %1415 = vmatprep.subr.bf16.mxu0 0
    %1416 = vmatpush1.bf16.msra.mxu0 0
    %1417 = vmatprep.subr.bf16.mxu0 0
    %1418 = vmatpush1.bf16.msra.mxu0 0
    %1419 = vmatprep.subr.bf16.mxu0 0
    %1420 = vmatpush1.bf16.msra.mxu0 0
    %1421 = vmatprep.subr.bf16.mxu0 0
    %1422 = vmatpush1.bf16.msra.mxu0 0
    %1423 = vmatprep.subr.bf16.mxu0 0
    %1424 = vmatpush1.bf16.msra.mxu0 0
    %1425 = vmatprep.subr.bf16.mxu0 0
    %1426 = vmatpush1.bf16.msra.mxu0 0
    %1427 = vmatprep.subr.bf16.mxu0 0
    %1428 = vmatpush1.bf16.msra.mxu0 0
    %1429 = vmatprep.mubr.bf16.mxu0 0
    %1430 = vmatmul.mubr.bf16.gmra.mrb[0].mxu0 %v1317
    %v1431 = vpop.f32.mrb[0].mxu0
    %v1432 = vadd.f32 0.0, %v1431
    %v1433 = vpop.f32.mrb[0].mxu0
    %v1434 = vpop.f32.mrb[0].mxu0
    %v1435 = vadd.f32 0.0, %v1434
    %v1436 = vpop.f32.mrb[0].mxu0
    %1437 = vmatprep.mubr.bf16.mxu0 0
    %1438 = vmatmul.mubr.bf16.gmra.mrb[0].mxu0 %v1318
    %v1439 = vpop.f32.mrb[0].mxu0
    %v1440 = vadd.f32 0.0, %v1439
    %v1441 = vpop.f32.mrb[0].mxu0
    %v1442 = vpop.f32.mrb[0].mxu0
    %v1443 = vadd.f32 0.0, %v1442
    %v1444 = vpop.f32.mrb[0].mxu0
    %1445 = vmatprep.mubr.bf16.mxu0 0
    %1446 = vmatmul.mubr.bf16.gmra.mrb[0].mxu0 %v1319
    %v1447 = vpop.f32.mrb[0].mxu0
    %v1448 = vadd.f32 0.0, %v1447
    %v1449 = vpop.f32.mrb[0].mxu0
    %v1450 = vpop.f32.mrb[0].mxu0
    %v1451 = vadd.f32 0.0, %v1450
    %v1452 = vpop.f32.mrb[0].mxu0
    %1453 = vmatprep.mubr.bf16.mxu0 0
    %1454 = vmatmul.mubr.bf16.gmra.mrb[0].mxu0 %v1320
    %v1455 = vpop.f32.mrb[0].mxu0
    %v1456 = vadd.f32 0.0, %v1455
    %v1457 = vpop.f32.mrb[0].mxu0
    %v1458 = vpop.f32.mrb[0].mxu0
    %v1459 = vadd.f32 0.0, %v1458
    %v1460 = vpop.f32.mrb[0].mxu0
    %1461 = vmatprep.mubr.bf16.mxu0 0
    %1462 = vmatmul.mubr.bf16.gmra.mrb[0].mxu0 %v1321
    %v1463 = vpop.f32.mrb[0].mxu0
    %v1464 = vadd.f32 0.0, %v1463
    %v1465 = vpop.f32.mrb[0].mxu0
    %v1466 = vpop.f32.mrb[0].mxu0
    %v1467 = vadd.f32 0.0, %v1466
    %v1468 = vpop.f32.mrb[0].mxu0
    %1469 = vmatprep.mubr.bf16.mxu0 0
    %1470 = vmatmul.mubr.bf16.gmra.mrb[0].mxu0 %v1322
    %v1471 = vpop.f32.mrb[0].mxu0
    %v1472 = vadd.f32 0.0, %v1471
    %v1473 = vpop.f32.mrb[0].mxu0
    %v1474 = vpop.f32.mrb[0].mxu0
    %v1475 = vadd.f32 0.0, %v1474
    %v1476 = vpop.f32.mrb[0].mxu0
    %1477 = vmatprep.mubr.bf16.mxu0 0
    %1478 = vmatmul.mubr.bf16.gmra.mrb[0].mxu0 %v1323
    %v1479 = vpop.f32.mrb[0].mxu0
    %v1480 = vadd.f32 0.0, %v1479
    %v1481 = vpop.f32.mrb[0].mxu0
    %v1482 = vpop.f32.mrb[0].mxu0
    %v1483 = vadd.f32 0.0, %v1482
    %v1484 = vpop.f32.mrb[0].mxu0
    %1485 = vmatprep.mubr.bf16.mxu0 0
    %1486 = vmatmul.mubr.bf16.gmra.mrb[0].mxu0 %v1324
    %v1487 = vpop.f32.mrb[0].mxu0
    %v1488 = vadd.f32 0.0, %v1487
    %v1489 = vpop.f32.mrb[0].mxu0
    %v1490 = vpop.f32.mrb[0].mxu0
    %v1491 = vadd.f32 0.0, %v1490
    %v1492 = vpop.f32.mrb[0].mxu0
    %1493 = vmatprep.mubr.bf16.mxu0 0
    %1494 = vmatmul.mubr.bf16.gmra.mrb[0].mxu0 %v1325
    %v1495 = vpop.f32.mrb[0].mxu0
    %v1496 = vadd.f32 0.0, %v1495
    %v1497 = vpop.f32.mrb[0].mxu0
    %v1498 = vpop.f32.mrb[0].mxu0
    %v1499 = vadd.f32 0.0, %v1498
    %v1500 = vpop.f32.mrb[0].mxu0
    %1501 = vmatprep.mubr.bf16.mxu0 0
    %1502 = vmatmul.mubr.bf16.gmra.mrb[0].mxu0 %v1326
    %v1503 = vpop.f32.mrb[0].mxu0
    %v1504 = vadd.f32 0.0, %v1503
    %v1505 = vpop.f32.mrb[0].mxu0
    %v1506 = vpop.f32.mrb[0].mxu0
    %v1507 = vadd.f32 0.0, %v1506
    %v1508 = vpop.f32.mrb[0].mxu0
    %1509 = vmatprep.mubr.bf16.mxu0 0
    %1510 = vmatmul.mubr.bf16.gmra.mrb[0].mxu0 %v1327
    %v1511 = vpop.f32.mrb[0].mxu0
    %v1512 = vadd.f32 0.0, %v1511
    %v1513 = vpop.f32.mrb[0].mxu0
    %v1514 = vpop.f32.mrb[0].mxu0
    %v1515 = vadd.f32 0.0, %v1514
    %v1516 = vpop.f32.mrb[0].mxu0
    %1517 = vmatprep.mubr.bf16.mxu0 0
    %1518 = vmatmul.mubr.bf16.gmra.mrb[0].mxu0 %v1328
    %v1519 = vpop.f32.mrb[0].mxu0
    %v1520 = vadd.f32 0.0, %v1519
    %v1521 = vpop.f32.mrb[0].mxu0
    %v1522 = vpop.f32.mrb[0].mxu0
    %v1523 = vadd.f32 0.0, %v1522
    %v1524 = vpop.f32.mrb[0].mxu0
    %1525 = vmatprep.mubr.bf16.mxu0 0
    %1526 = vmatmul.mubr.bf16.gmra.mrb[0].mxu0 %v1329
    %v1527 = vpop.f32.mrb[0].mxu0
    %v1528 = vadd.f32 0.0, %v1527
    %v1529 = vpop.f32.mrb[0].mxu0
    %v1530 = vpop.f32.mrb[0].mxu0
    %v1531 = vadd.f32 0.0, %v1530
    %v1532 = vpop.f32.mrb[0].mxu0
    %1533 = vmatprep.mubr.bf16.mxu0 0
    %1534 = vmatmul.mubr.bf16.gmra.mrb[0].mxu0 %v1330
    %v1535 = vpop.f32.mrb[0].mxu0
    %v1536 = vadd.f32 0.0, %v1535
    %v1537 = vpop.f32.mrb[0].mxu0
    %v1538 = vpop.f32.mrb[0].mxu0
    %v1539 = vadd.f32 0.0, %v1538
    %v1540 = vpop.f32.mrb[0].mxu0
    %1541 = vmatprep.mubr.bf16.mxu0 0
    %1542 = vmatmul.mubr.bf16.gmra.mrb[0].mxu0 %v1331
    %v1543 = vpop.f32.mrb[0].mxu0
    %v1544 = vadd.f32 0.0, %v1543
    %v1545 = vpop.f32.mrb[0].mxu0
    %v1546 = vpop.f32.mrb[0].mxu0
    %v1547 = vadd.f32 0.0, %v1546
    %v1548 = vpop.f32.mrb[0].mxu0
    %1549 = vmatprep.mubr.bf16.mxu0 0
    %1550 = vmatmul.mubr.bf16.gmra.mrb[0].mxu0 %v1332
    %v1551 = vpop.f32.mrb[0].mxu0
    %v1552 = vadd.f32 0.0, %v1551
    %v1553 = vpop.f32.mrb[0].mxu0
    %v1554 = vpop.f32.mrb[0].mxu0
    %v1555 = vadd.f32 0.0, %v1554
    %v1556 = vpop.f32.mrb[0].mxu0
    %1557 = vdwg.mxu0
    %v1558 = vpack.c.bf16 %v1435, %v1432
    %v1559 = vpack.c.bf16 %v1443, %v1440
    %v1560 = vpack.c.bf16 %v1451, %v1448
    %v1561 = vpack.c.bf16 %v1459, %v1456
    %v1562 = vpack.c.bf16 %v1467, %v1464
    %v1563 = vpack.c.bf16 %v1475, %v1472
    %v1564 = vpack.c.bf16 %v1483, %v1480
    %v1565 = vpack.c.bf16 %v1491, %v1488
    %v1566 = vpack.c.bf16 %v1499, %v1496
    %v1567 = vpack.c.bf16 %v1507, %v1504
    %v1568 = vpack.c.bf16 %v1515, %v1512
    %v1569 = vpack.c.bf16 %v1523, %v1520
    %v1570 = vpack.c.bf16 %v1531, %v1528
    %v1571 = vpack.c.bf16 %v1539, %v1536
    %v1572 = vpack.c.bf16 %v1547, %v1544
    %v1573 = vpack.c.bf16 %v1555, %v1552
    %v1574 = vld [vmem:[%s7] sm:$0x1]
    %v1576 = vlaneseq
    %v1577 = vshrl.u32 %v1576, 7
    %v1578 = vsub.s32 0, %v1577
    %v1579 = vrot.slane %v1574, %v1578
    %1581 = vmatprep.subr.bf16.mxu0 0
    %1582 = vmatpush1.bf16.msra.mxu0 %v1558
    %1583 = vmatprep.subr.bf16.mxu0 0
    %1584 = vmatpush1.bf16.msra.mxu0 %v1559
    %1585 = vmatprep.subr.bf16.mxu0 0
    %1586 = vmatpush1.bf16.msra.mxu0 %v1560
    %1587 = vmatprep.subr.bf16.mxu0 0
    %1588 = vmatpush1.bf16.msra.mxu0 %v1561
    %1589 = vmatprep.subr.bf16.mxu0 0
    %1590 = vmatpush1.bf16.msra.mxu0 %v1562
    %1591 = vmatprep.subr.bf16.mxu0 0
    %1592 = vmatpush1.bf16.msra.mxu0 %v1563
    %1593 = vmatprep.subr.bf16.mxu0 0
    %1594 = vmatpush1.bf16.msra.mxu0 %v1564
    %1595 = vmatprep.subr.bf16.mxu0 0
    %1596 = vmatpush1.bf16.msra.mxu0 %v1565
    %1597 = vmatprep.subr.bf16.mxu0 0
    %1598 = vmatpush1.bf16.msra.mxu0 %v1566
    %1599 = vmatprep.subr.bf16.mxu0 0
    %1600 = vmatpush1.bf16.msra.mxu0 %v1567
    %1601 = vmatprep.subr.bf16.mxu0 0
    %1602 = vmatpush1.bf16.msra.mxu0 %v1568
    %1603 = vmatprep.subr.bf16.mxu0 0
    %1604 = vmatpush1.bf16.msra.mxu0 %v1569
    %1605 = vmatprep.subr.bf16.mxu0 0
    %1606 = vmatpush1.bf16.msra.mxu0 %v1570
    %1607 = vmatprep.subr.bf16.mxu0 0
    %1608 = vmatpush1.bf16.msra.mxu0 %v1571
    %1609 = vmatprep.subr.bf16.mxu0 0
    %1610 = vmatpush1.bf16.msra.mxu0 %v1572
    %1611 = vmatprep.subr.bf16.mxu0 0
    %1612 = vmatpush1.bf16.msra.mxu0 %v1573
    %1613 = vmatprep.mubr.bf16.mxu0 %v604
    %1614 = vmatmul.mubr.bf16.gmra.mrb[0].mxu0 %v603
    %v1615 = vpop.f32.mrb[0].mxu0
    %v1616 = vadd.f32 %v1579, %v1615
    %v1617 = vpop.f32.mrb[0].mxu0
    %v1618 = vpop.f32.mrb[0].mxu0
    %v1619 = vadd.f32 %v1579, %v1618
    %v1620 = vpop.f32.mrb[0].mxu0
    %1621 = vmatprep.mubr.bf16.mxu0 %v606
    %1622 = vmatmul.mubr.bf16.gmra.mrb[0].mxu0 %v605
    %v1623 = vpop.f32.mrb[0].mxu0
    %v1624 = vadd.f32 %v1579, %v1623
    %v1625 = vpop.f32.mrb[0].mxu0
    %v1626 = vpop.f32.mrb[0].mxu0
    %v1627 = vadd.f32 %v1579, %v1626
    %v1628 = vpop.f32.mrb[0].mxu0
    %1629 = vmatprep.mubr.bf16.mxu0 %v608
    %1630 = vmatmul.mubr.bf16.gmra.mrb[0].mxu0 %v607
    %v1631 = vpop.f32.mrb[0].mxu0
    %v1632 = vadd.f32 %v1579, %v1631
    %v1633 = vpop.f32.mrb[0].mxu0
    %v1634 = vpop.f32.mrb[0].mxu0
    %v1635 = vadd.f32 %v1579, %v1634
    %v1636 = vpop.f32.mrb[0].mxu0
    %1637 = vmatprep.mubr.bf16.mxu0 %v610
    %1638 = vmatmul.mubr.bf16.gmra.mrb[0].mxu0 %v609
    %v1639 = vpop.f32.mrb[0].mxu0
    %v1640 = vadd.f32 %v1579, %v1639
    %v1641 = vpop.f32.mrb[0].mxu0
    %v1642 = vpop.f32.mrb[0].mxu0
    %v1643 = vadd.f32 %v1579, %v1642
    %v1644 = vpop.f32.mrb[0].mxu0
    %1645 = vmatprep.mubr.bf16.mxu0 %v612
    %1646 = vmatmul.mubr.bf16.gmra.mrb[0].mxu0 %v611
    %v1647 = vpop.f32.mrb[0].mxu0
    %v1648 = vadd.f32 %v1579, %v1647
    %v1649 = vpop.f32.mrb[0].mxu0
    %v1650 = vpop.f32.mrb[0].mxu0
    %v1651 = vadd.f32 %v1579, %v1650
    %v1652 = vpop.f32.mrb[0].mxu0
    %1653 = vmatprep.mubr.bf16.mxu0 %v614
    %1654 = vmatmul.mubr.bf16.gmra.mrb[0].mxu0 %v613
    %v1655 = vpop.f32.mrb[0].mxu0
    %v1656 = vadd.f32 %v1579, %v1655
    %v1657 = vpop.f32.mrb[0].mxu0
    %v1658 = vpop.f32.mrb[0].mxu0
    %v1659 = vadd.f32 %v1579, %v1658
    %v1660 = vpop.f32.mrb[0].mxu0
    %1661 = vmatprep.mubr.bf16.mxu0 %v616
    %1662 = vmatmul.mubr.bf16.gmra.mrb[0].mxu0 %v615
    %v1663 = vpop.f32.mrb[0].mxu0
    %v1664 = vadd.f32 %v1579, %v1663
    %v1665 = vpop.f32.mrb[0].mxu0
    %v1666 = vpop.f32.mrb[0].mxu0
    %v1667 = vadd.f32 %v1579, %v1666
    %v1668 = vpop.f32.mrb[0].mxu0
    %1669 = vmatprep.mubr.bf16.mxu0 %v618
    %1670 = vmatmul.mubr.bf16.gmra.mrb[0].mxu0 %v617
    %v1671 = vpop.f32.mrb[0].mxu0
    %v1672 = vadd.f32 %v1579, %v1671
    %v1673 = vpop.f32.mrb[0].mxu0
    %v1674 = vpop.f32.mrb[0].mxu0
    %v1675 = vadd.f32 %v1579, %v1674
    %v1676 = vpop.f32.mrb[0].mxu0
    %1677 = vmatprep.mubr.bf16.mxu0 %v620
    %1678 = vmatmul.mubr.bf16.gmra.mrb[0].mxu0 %v619
    %v1679 = vpop.f32.mrb[0].mxu0
    %v1680 = vadd.f32 %v1579, %v1679
    %v1681 = vpop.f32.mrb[0].mxu0
    %v1682 = vpop.f32.mrb[0].mxu0
    %v1683 = vadd.f32 %v1579, %v1682
    %v1684 = vpop.f32.mrb[0].mxu0
    %1685 = vmatprep.mubr.bf16.mxu0 %v622
    %1686 = vmatmul.mubr.bf16.gmra.mrb[0].mxu0 %v621
    %v1687 = vpop.f32.mrb[0].mxu0
    %v1688 = vadd.f32 %v1579, %v1687
    %v1689 = vpop.f32.mrb[0].mxu0
    %v1690 = vpop.f32.mrb[0].mxu0
    %v1691 = vadd.f32 %v1579, %v1690
    %v1692 = vpop.f32.mrb[0].mxu0
    %1693 = vmatprep.mubr.bf16.mxu0 %v624
    %1694 = vmatmul.mubr.bf16.gmra.mrb[0].mxu0 %v623
    %v1695 = vpop.f32.mrb[0].mxu0
    %v1696 = vadd.f32 %v1579, %v1695
    %v1697 = vpop.f32.mrb[0].mxu0
    %v1698 = vpop.f32.mrb[0].mxu0
    %v1699 = vadd.f32 %v1579, %v1698
    %v1700 = vpop.f32.mrb[0].mxu0
    %1701 = vmatprep.mubr.bf16.mxu0 %v626
    %1702 = vmatmul.mubr.bf16.gmra.mrb[0].mxu0 %v625
    %v1703 = vpop.f32.mrb[0].mxu0
    %v1704 = vadd.f32 %v1579, %v1703
    %v1705 = vpop.f32.mrb[0].mxu0
    %v1706 = vpop.f32.mrb[0].mxu0
    %v1707 = vadd.f32 %v1579, %v1706
    %v1708 = vpop.f32.mrb[0].mxu0
    %1709 = vmatprep.mubr.bf16.mxu0 %v628
    %1710 = vmatmul.mubr.bf16.gmra.mrb[0].mxu0 %v627
    %v1711 = vpop.f32.mrb[0].mxu0
    %v1712 = vadd.f32 %v1579, %v1711
    %v1713 = vpop.f32.mrb[0].mxu0
    %v1714 = vpop.f32.mrb[0].mxu0
    %v1715 = vadd.f32 %v1579, %v1714
    %v1716 = vpop.f32.mrb[0].mxu0
    %1717 = vmatprep.mubr.bf16.mxu0 %v630
    %1718 = vmatmul.mubr.bf16.gmra.mrb[0].mxu0 %v629
    %v1719 = vpop.f32.mrb[0].mxu0
    %v1720 = vadd.f32 %v1579, %v1719
    %v1721 = vpop.f32.mrb[0].mxu0
    %v1722 = vpop.f32.mrb[0].mxu0
    %v1723 = vadd.f32 %v1579, %v1722
    %v1724 = vpop.f32.mrb[0].mxu0
    %1725 = vmatprep.mubr.bf16.mxu0 %v632
    %1726 = vmatmul.mubr.bf16.gmra.mrb[0].mxu0 %v631
    %v1727 = vpop.f32.mrb[0].mxu0
    %v1728 = vadd.f32 %v1579, %v1727
    %v1729 = vpop.f32.mrb[0].mxu0
    %v1730 = vpop.f32.mrb[0].mxu0
    %v1731 = vadd.f32 %v1579, %v1730
    %v1732 = vpop.f32.mrb[0].mxu0
    %1733 = vmatprep.mubr.bf16.mxu0 %v634
    %1734 = vmatmul.mubr.bf16.gmra.mrb[0].mxu0 %v633
    %v1735 = vpop.f32.mrb[0].mxu0
    %v1736 = vadd.f32 %v1579, %v1735
    %v1737 = vpop.f32.mrb[0].mxu0
    %v1738 = vpop.f32.mrb[0].mxu0
    %v1739 = vadd.f32 %v1579, %v1738
    %v1740 = vpop.f32.mrb[0].mxu0
    %1741 = vdwg.mxu0
    %v1742 = vlaneseq
    %v1743 = vand.u32 %v1742, 127
    %vm1744 = vcmp.lt.s32.totalorder %v1743, 2
    %v1745 = vsel %vm1744, %v1616, -1e+30
    %v1746 = vsel %vm1744, %v1619, -1e+30
    %v1747 = vsel %vm1744, %v1624, -1e+30
    %v1748 = vsel %vm1744, %v1627, -1e+30
    %v1749 = vsel %vm1744, %v1632, -1e+30
    %v1750 = vsel %vm1744, %v1635, -1e+30
    %v1751 = vsel %vm1744, %v1640, -1e+30
    %v1752 = vsel %vm1744, %v1643, -1e+30
    %v1753 = vsel %vm1744, %v1648, -1e+30
    %v1754 = vsel %vm1744, %v1651, -1e+30
    %v1755 = vsel %vm1744, %v1656, -1e+30
    %v1756 = vsel %vm1744, %v1659, -1e+30
    %v1757 = vsel %vm1744, %v1664, -1e+30
    %v1758 = vsel %vm1744, %v1667, -1e+30
    %v1759 = vsel %vm1744, %v1672, -1e+30
    %v1760 = vsel %vm1744, %v1675, -1e+30
    %v1761 = vsel %vm1744, %v1680, -1e+30
    %v1762 = vsel %vm1744, %v1683, -1e+30
    %v1763 = vsel %vm1744, %v1688, -1e+30
    %v1764 = vsel %vm1744, %v1691, -1e+30
    %v1765 = vsel %vm1744, %v1696, -1e+30
    %v1766 = vsel %vm1744, %v1699, -1e+30
    %v1767 = vsel %vm1744, %v1704, -1e+30
    %v1768 = vsel %vm1744, %v1707, -1e+30
    %v1769 = vsel %vm1744, %v1712, -1e+30
    %v1770 = vsel %vm1744, %v1715, -1e+30
    %v1771 = vsel %vm1744, %v1720, -1e+30
    %v1772 = vsel %vm1744, %v1723, -1e+30
    %v1773 = vsel %vm1744, %v1728, -1e+30
    %v1774 = vsel %vm1744, %v1731, -1e+30
    %v1775 = vsel %vm1744, %v1736, -1e+30
    %v1776 = vsel %vm1744, %v1739, -1e+30
    %1777 = vmax.xlane.f32.xlu0 %v1745
    %v1778 = vpop.xlane.xlu0 %1777
    %1779 = vmax.xlane.f32.xlu0 %v1746
    %v1780 = vpop.xlane.xlu0 %1779
    %1781 = vmax.xlane.f32.xlu0 %v1747
    %v1782 = vpop.xlane.xlu0 %1781
    %1783 = vmax.xlane.f32.xlu0 %v1748
    %v1784 = vpop.xlane.xlu0 %1783
    %1785 = vmax.xlane.f32.xlu0 %v1749
    %v1786 = vpop.xlane.xlu0 %1785
    %1787 = vmax.xlane.f32.xlu0 %v1750
    %v1788 = vpop.xlane.xlu0 %1787
    %1789 = vmax.xlane.f32.xlu0 %v1751
    %v1790 = vpop.xlane.xlu0 %1789
    %1791 = vmax.xlane.f32.xlu0 %v1752
    %v1792 = vpop.xlane.xlu0 %1791
    %1793 = vmax.xlane.f32.xlu0 %v1753
    %v1794 = vpop.xlane.xlu0 %1793
    %1795 = vmax.xlane.f32.xlu0 %v1754
    %v1796 = vpop.xlane.xlu0 %1795
    %1797 = vmax.xlane.f32.xlu0 %v1755
    %v1798 = vpop.xlane.xlu0 %1797
    %1799 = vmax.xlane.f32.xlu0 %v1756
    %v1800 = vpop.xlane.xlu0 %1799
    %1801 = vmax.xlane.f32.xlu0 %v1757
    %v1802 = vpop.xlane.xlu0 %1801
    %1803 = vmax.xlane.f32.xlu0 %v1758
    %v1804 = vpop.xlane.xlu0 %1803
    %1805 = vmax.xlane.f32.xlu0 %v1759
    %v1806 = vpop.xlane.xlu0 %1805
    %1807 = vmax.xlane.f32.xlu0 %v1760
    %v1808 = vpop.xlane.xlu0 %1807
    %1809 = vmax.xlane.f32.xlu0 %v1761
    %v1810 = vpop.xlane.xlu0 %1809
    %1811 = vmax.xlane.f32.xlu0 %v1762
    %v1812 = vpop.xlane.xlu0 %1811
    %1813 = vmax.xlane.f32.xlu0 %v1763
    %v1814 = vpop.xlane.xlu0 %1813
    %1815 = vmax.xlane.f32.xlu0 %v1764
    %v1816 = vpop.xlane.xlu0 %1815
    %1817 = vmax.xlane.f32.xlu0 %v1765
    %v1818 = vpop.xlane.xlu0 %1817
    %1819 = vmax.xlane.f32.xlu0 %v1766
    %v1820 = vpop.xlane.xlu0 %1819
    %1821 = vmax.xlane.f32.xlu0 %v1767
    %v1822 = vpop.xlane.xlu0 %1821
    %1823 = vmax.xlane.f32.xlu0 %v1768
    %v1824 = vpop.xlane.xlu0 %1823
    %1825 = vmax.xlane.f32.xlu0 %v1769
    %v1826 = vpop.xlane.xlu0 %1825
    %1827 = vmax.xlane.f32.xlu0 %v1770
    %v1828 = vpop.xlane.xlu0 %1827
    %1829 = vmax.xlane.f32.xlu0 %v1771
    %v1830 = vpop.xlane.xlu0 %1829
    %1831 = vmax.xlane.f32.xlu0 %v1772
    %v1832 = vpop.xlane.xlu0 %1831
    %1833 = vmax.xlane.f32.xlu0 %v1773
    %v1834 = vpop.xlane.xlu0 %1833
    %1835 = vmax.xlane.f32.xlu0 %v1774
    %v1836 = vpop.xlane.xlu0 %1835
    %1837 = vmax.xlane.f32.xlu0 %v1775
    %v1838 = vpop.xlane.xlu0 %1837
    %1839 = vmax.xlane.f32.xlu0 %v1776
    %v1840 = vpop.xlane.xlu0 %1839
    %v1841 = vsub.f32 %v1745, %v1778
    %v1842 = vsub.f32 %v1746, %v1780
    %v1843 = vsub.f32 %v1747, %v1782
    %v1844 = vsub.f32 %v1748, %v1784
    %v1845 = vsub.f32 %v1749, %v1786
    %v1846 = vsub.f32 %v1750, %v1788
    %v1847 = vsub.f32 %v1751, %v1790
    %v1848 = vsub.f32 %v1752, %v1792
    %v1849 = vsub.f32 %v1753, %v1794
    %v1850 = vsub.f32 %v1754, %v1796
    %v1851 = vsub.f32 %v1755, %v1798
    %v1852 = vsub.f32 %v1756, %v1800
    %v1853 = vsub.f32 %v1757, %v1802
    %v1854 = vsub.f32 %v1758, %v1804
    %v1855 = vsub.f32 %v1759, %v1806
    %v1856 = vsub.f32 %v1760, %v1808
    %v1857 = vsub.f32 %v1761, %v1810
    %v1858 = vsub.f32 %v1762, %v1812
    %v1859 = vsub.f32 %v1763, %v1814
    %v1860 = vsub.f32 %v1764, %v1816
    %v1861 = vsub.f32 %v1765, %v1818
    %v1862 = vsub.f32 %v1766, %v1820
    %v1863 = vsub.f32 %v1767, %v1822
    %v1864 = vsub.f32 %v1768, %v1824
    %v1865 = vsub.f32 %v1769, %v1826
    %v1866 = vsub.f32 %v1770, %v1828
    %v1867 = vsub.f32 %v1771, %v1830
    %v1868 = vsub.f32 %v1772, %v1832
    %v1869 = vsub.f32 %v1773, %v1834
    %v1870 = vsub.f32 %v1774, %v1836
    %v1871 = vsub.f32 %v1775, %v1838
    %v1872 = vsub.f32 %v1776, %v1840
    %v1873 = vmul.f32 %v1841, 1.442695
    %v1874 = vpow.pop %v1873
    %v1875 = vmul.f32 %v1842, 1.442695
    %v1876 = vpow.pop %v1875
    %v1877 = vmul.f32 %v1843, 1.442695
    %v1878 = vpow.pop %v1877
    %v1879 = vmul.f32 %v1844, 1.442695
    %v1880 = vpow.pop %v1879
    %v1881 = vmul.f32 %v1845, 1.442695
    %v1882 = vpow.pop %v1881
    %v1883 = vmul.f32 %v1846, 1.442695
    %v1884 = vpow.pop %v1883
    %v1885 = vmul.f32 %v1847, 1.442695
    %v1886 = vpow.pop %v1885
    %v1887 = vmul.f32 %v1848, 1.442695
    %v1888 = vpow.pop %v1887
    %v1889 = vmul.f32 %v1849, 1.442695
    %v1890 = vpow.pop %v1889
    %v1891 = vmul.f32 %v1850, 1.442695
    %v1892 = vpow.pop %v1891
    %v1893 = vmul.f32 %v1851, 1.442695
    %v1894 = vpow.pop %v1893
    %v1895 = vmul.f32 %v1852, 1.442695
    %v1896 = vpow.pop %v1895
    %v1897 = vmul.f32 %v1853, 1.442695
    %v1898 = vpow.pop %v1897
    %v1899 = vmul.f32 %v1854, 1.442695
    %v1900 = vpow.pop %v1899
    %v1901 = vmul.f32 %v1855, 1.442695
    %v1902 = vpow.pop %v1901
    %v1903 = vmul.f32 %v1856, 1.442695
    %v1904 = vpow.pop %v1903
    %v1905 = vmul.f32 %v1857, 1.442695
    %v1906 = vpow.pop %v1905
    %v1907 = vmul.f32 %v1858, 1.442695
    %v1908 = vpow.pop %v1907
    %v1909 = vmul.f32 %v1859, 1.442695
    %v1910 = vpow.pop %v1909
    %v1911 = vmul.f32 %v1860, 1.442695
    %v1912 = vpow.pop %v1911
    %v1913 = vmul.f32 %v1861, 1.442695
    %v1914 = vpow.pop %v1913
    %v1915 = vmul.f32 %v1862, 1.442695
    %v1916 = vpow.pop %v1915
    %v1917 = vmul.f32 %v1863, 1.442695
    %v1918 = vpow.pop %v1917
    %v1919 = vmul.f32 %v1864, 1.442695
    %v1920 = vpow.pop %v1919
    %v1921 = vmul.f32 %v1865, 1.442695
    %v1922 = vpow.pop %v1921
    %v1923 = vmul.f32 %v1866, 1.442695
    %v1924 = vpow.pop %v1923
    %v1925 = vmul.f32 %v1867, 1.442695
    %v1926 = vpow.pop %v1925
    %v1927 = vmul.f32 %v1868, 1.442695
    %v1928 = vpow.pop %v1927
    %v1929 = vmul.f32 %v1869, 1.442695
    %v1930 = vpow.pop %v1929
    %v1931 = vmul.f32 %v1870, 1.442695
    %v1932 = vpow.pop %v1931
    %v1933 = vmul.f32 %v1871, 1.442695
    %v1934 = vpow.pop %v1933
    %v1935 = vmul.f32 %v1872, 1.442695
    %v1936 = vpow.pop %v1935
    %1937 = vadd.xlane.f32.xlu0 %v1874
    %v1938 = vpop.xlane.xlu0 %1937
    %1939 = vadd.xlane.f32.xlu0 %v1876
    %v1940 = vpop.xlane.xlu0 %1939
    %1941 = vadd.xlane.f32.xlu0 %v1878
    %v1942 = vpop.xlane.xlu0 %1941
    %1943 = vadd.xlane.f32.xlu0 %v1880
    %v1944 = vpop.xlane.xlu0 %1943
    %1945 = vadd.xlane.f32.xlu0 %v1882
    %v1946 = vpop.xlane.xlu0 %1945
    %1947 = vadd.xlane.f32.xlu0 %v1884
    %v1948 = vpop.xlane.xlu0 %1947
    %1949 = vadd.xlane.f32.xlu0 %v1886
    %v1950 = vpop.xlane.xlu0 %1949
    %1951 = vadd.xlane.f32.xlu0 %v1888
    %v1952 = vpop.xlane.xlu0 %1951
    %1953 = vadd.xlane.f32.xlu0 %v1890
    %v1954 = vpop.xlane.xlu0 %1953
    %1955 = vadd.xlane.f32.xlu0 %v1892
    %v1956 = vpop.xlane.xlu0 %1955
    %1957 = vadd.xlane.f32.xlu0 %v1894
    %v1958 = vpop.xlane.xlu0 %1957
    %1959 = vadd.xlane.f32.xlu0 %v1896
    %v1960 = vpop.xlane.xlu0 %1959
    %1961 = vadd.xlane.f32.xlu0 %v1898
    %v1962 = vpop.xlane.xlu0 %1961
    %1963 = vadd.xlane.f32.xlu0 %v1900
    %v1964 = vpop.xlane.xlu0 %1963
    %1965 = vadd.xlane.f32.xlu0 %v1902
    %v1966 = vpop.xlane.xlu0 %1965
    %1967 = vadd.xlane.f32.xlu0 %v1904
    %v1968 = vpop.xlane.xlu0 %1967
    %1969 = vadd.xlane.f32.xlu0 %v1906
    %v1970 = vpop.xlane.xlu0 %1969
    %1971 = vadd.xlane.f32.xlu0 %v1908
    %v1972 = vpop.xlane.xlu0 %1971
    %1973 = vadd.xlane.f32.xlu0 %v1910
    %v1974 = vpop.xlane.xlu0 %1973
    %1975 = vadd.xlane.f32.xlu0 %v1912
    %v1976 = vpop.xlane.xlu0 %1975
    %1977 = vadd.xlane.f32.xlu0 %v1914
    %v1978 = vpop.xlane.xlu0 %1977
    %1979 = vadd.xlane.f32.xlu0 %v1916
    %v1980 = vpop.xlane.xlu0 %1979
    %1981 = vadd.xlane.f32.xlu0 %v1918
    %v1982 = vpop.xlane.xlu0 %1981
    %1983 = vadd.xlane.f32.xlu0 %v1920
    %v1984 = vpop.xlane.xlu0 %1983
    %1985 = vadd.xlane.f32.xlu0 %v1922
    %v1986 = vpop.xlane.xlu0 %1985
    %1987 = vadd.xlane.f32.xlu0 %v1924
    %v1988 = vpop.xlane.xlu0 %1987
    %1989 = vadd.xlane.f32.xlu0 %v1926
    %v1990 = vpop.xlane.xlu0 %1989
    %1991 = vadd.xlane.f32.xlu0 %v1928
    %v1992 = vpop.xlane.xlu0 %1991
    %1993 = vadd.xlane.f32.xlu0 %v1930
    %v1994 = vpop.xlane.xlu0 %1993
    %1995 = vadd.xlane.f32.xlu0 %v1932
    %v1996 = vpop.xlane.xlu0 %1995
    %1997 = vadd.xlane.f32.xlu0 %v1934
    %v1998 = vpop.xlane.xlu0 %1997
    %1999 = vadd.xlane.f32.xlu0 %v1936
    %v2000 = vpop.xlane.xlu0 %1999
    %v2001 = vlog2.pop %v1938
    %v2002 = vmul.f32 %v2001, 0.6931472
    %v2003 = vlog2.pop %v1940
    %v2004 = vmul.f32 %v2003, 0.6931472
    %v2005 = vlog2.pop %v1942
    %v2006 = vmul.f32 %v2005, 0.6931472
    %v2007 = vlog2.pop %v1944
    %v2008 = vmul.f32 %v2007, 0.6931472
    %v2009 = vlog2.pop %v1946
    %v2010 = vmul.f32 %v2009, 0.6931472
    %v2011 = vlog2.pop %v1948
    %v2012 = vmul.f32 %v2011, 0.6931472
    %v2013 = vlog2.pop %v1950
    %v2014 = vmul.f32 %v2013, 0.6931472
    %v2015 = vlog2.pop %v1952
    %v2016 = vmul.f32 %v2015, 0.6931472
    %v2017 = vlog2.pop %v1954
    %v2018 = vmul.f32 %v2017, 0.6931472
    %v2019 = vlog2.pop %v1956
    %v2020 = vmul.f32 %v2019, 0.6931472
    %v2021 = vlog2.pop %v1958
    %v2022 = vmul.f32 %v2021, 0.6931472
    %v2023 = vlog2.pop %v1960
    %v2024 = vmul.f32 %v2023, 0.6931472
    %v2025 = vlog2.pop %v1962
    %v2026 = vmul.f32 %v2025, 0.6931472
    %v2027 = vlog2.pop %v1964
    %v2028 = vmul.f32 %v2027, 0.6931472
    %v2029 = vlog2.pop %v1966
    %v2030 = vmul.f32 %v2029, 0.6931472
    %v2031 = vlog2.pop %v1968
    %v2032 = vmul.f32 %v2031, 0.6931472
    %v2033 = vlog2.pop %v1970
    %v2034 = vmul.f32 %v2033, 0.6931472
    %v2035 = vlog2.pop %v1972
    %v2036 = vmul.f32 %v2035, 0.6931472
    %v2037 = vlog2.pop %v1974
    %v2038 = vmul.f32 %v2037, 0.6931472
    %v2039 = vlog2.pop %v1976
    %v2040 = vmul.f32 %v2039, 0.6931472
    %v2041 = vlog2.pop %v1978
    %v2042 = vmul.f32 %v2041, 0.6931472
    %v2043 = vlog2.pop %v1980
    %v2044 = vmul.f32 %v2043, 0.6931472
    %v2045 = vlog2.pop %v1982
    %v2046 = vmul.f32 %v2045, 0.6931472
    %v2047 = vlog2.pop %v1984
    %v2048 = vmul.f32 %v2047, 0.6931472
    %v2049 = vlog2.pop %v1986
    %v2050 = vmul.f32 %v2049, 0.6931472
    %v2051 = vlog2.pop %v1988
    %v2052 = vmul.f32 %v2051, 0.6931472
    %v2053 = vlog2.pop %v1990
    %v2054 = vmul.f32 %v2053, 0.6931472
    %v2055 = vlog2.pop %v1992
    %v2056 = vmul.f32 %v2055, 0.6931472
    %v2057 = vlog2.pop %v1994
    %v2058 = vmul.f32 %v2057, 0.6931472
    %v2059 = vlog2.pop %v1996
    %v2060 = vmul.f32 %v2059, 0.6931472
    %v2061 = vlog2.pop %v1998
    %v2062 = vmul.f32 %v2061, 0.6931472
    %v2063 = vlog2.pop %v2000
    %v2064 = vmul.f32 %v2063, 0.6931472
    %v2065 = vsub.f32 %v1841, %v2002
    %v2066 = vsub.f32 %v1842, %v2004
    %v2067 = vsub.f32 %v1843, %v2006
    %v2068 = vsub.f32 %v1844, %v2008
    %v2069 = vsub.f32 %v1845, %v2010
    %v2070 = vsub.f32 %v1846, %v2012
    %v2071 = vsub.f32 %v1847, %v2014
    %v2072 = vsub.f32 %v1848, %v2016
    %v2073 = vsub.f32 %v1849, %v2018
    %v2074 = vsub.f32 %v1850, %v2020
    %v2075 = vsub.f32 %v1851, %v2022
    %v2076 = vsub.f32 %v1852, %v2024
    %v2077 = vsub.f32 %v1853, %v2026
    %v2078 = vsub.f32 %v1854, %v2028
    %v2079 = vsub.f32 %v1855, %v2030
    %v2080 = vsub.f32 %v1856, %v2032
    %v2081 = vsub.f32 %v1857, %v2034
    %v2082 = vsub.f32 %v1858, %v2036
    %v2083 = vsub.f32 %v1859, %v2038
    %v2084 = vsub.f32 %v1860, %v2040
    %v2085 = vsub.f32 %v1861, %v2042
    %v2086 = vsub.f32 %v1862, %v2044
    %v2087 = vsub.f32 %v1863, %v2046
    %v2088 = vsub.f32 %v1864, %v2048
    %v2089 = vsub.f32 %v1865, %v2050
    %v2090 = vsub.f32 %v1866, %v2052
    %v2091 = vsub.f32 %v1867, %v2054
    %v2092 = vsub.f32 %v1868, %v2056
    %v2093 = vsub.f32 %v1869, %v2058
    %v2094 = vsub.f32 %v1870, %v2060
    %v2095 = vsub.f32 %v1871, %v2062
    %v2096 = vsub.f32 %v1872, %v2064
    %2097 = vst [vmem:[#allocation11] sm:$0xff] %v2065
    %2098 = vst [vmem:[#allocation11 + $0x8] sm:$0xff] %v2066
    %2099 = vst [vmem:[#allocation11 + $0x10] sm:$0xff] %v2067
    %2100 = vst [vmem:[#allocation11 + $0x18] sm:$0xff] %v2068
    %2101 = vst [vmem:[#allocation11 + $0x20] sm:$0xff] %v2069
    %2102 = vst [vmem:[#allocation11 + $0x28] sm:$0xff] %v2070
    %2103 = vst [vmem:[#allocation11 + $0x30] sm:$0xff] %v2071
    %2104 = vst [vmem:[#allocation11 + $0x38] sm:$0xff] %v2072
    %2105 = vst [vmem:[#allocation11 + $0x40] sm:$0xff] %v2073
    %2106 = vst [vmem:[#allocation11 + $0x48] sm:$0xff] %v2074
    %2107 = vst [vmem:[#allocation11 + $0x50] sm:$0xff] %v2075
    %2108 = vst [vmem:[#allocation11 + $0x58] sm:$0xff] %v2076
    %2109 = vst [vmem:[#allocation11 + $0x60] sm:$0xff] %v2077
    %2110 = vst [vmem:[#allocation11 + $0x68] sm:$0xff] %v2078
    %2111 = vst [vmem:[#allocation11 + $0x70] sm:$0xff] %v2079
    %2112 = vst [vmem:[#allocation11 + $0x78] sm:$0xff] %v2080
    %2113 = vst [vmem:[#allocation11 + $0x80] sm:$0xff] %v2081
    %2114 = vst [vmem:[#allocation11 + $0x88] sm:$0xff] %v2082
    %2115 = vst [vmem:[#allocation11 + $0x90] sm:$0xff] %v2083
    %2116 = vst [vmem:[#allocation11 + $0x98] sm:$0xff] %v2084
    %2117 = vst [vmem:[#allocation11 + $0xa0] sm:$0xff] %v2085
    %2118 = vst [vmem:[#allocation11 + $0xa8] sm:$0xff] %v2086
    %2119 = vst [vmem:[#allocation11 + $0xb0] sm:$0xff] %v2087
    %2120 = vst [vmem:[#allocation11 + $0xb8] sm:$0xff] %v2088
    %2121 = vst [vmem:[#allocation11 + $0xc0] sm:$0xff] %v2089
    %2122 = vst [vmem:[#allocation11 + $0xc8] sm:$0xff] %v2090
    %2123 = vst [vmem:[#allocation11 + $0xd0] sm:$0xff] %v2091
    %2124 = vst [vmem:[#allocation11 + $0xd8] sm:$0xff] %v2092
    %2125 = vst [vmem:[#allocation11 + $0xe0] sm:$0xff] %v2093
    %2126 = vst [vmem:[#allocation11 + $0xe8] sm:$0xff] %v2094
    %2127 = vst [vmem:[#allocation11 + $0xf0] sm:$0xff] %v2095
    %2128 = vst [vmem:[#allocation11 + $0xf8] sm:$0xff] %v2096
    // Predicated region
    $region54: #{tpu_custom_call.1} parent=1 // pred_check
      _
    $region55: #{tpu_custom_call.1} parent=1 // pred_check_branch
      %2130 = sbr.rel (0) target = $region57
    $region56: #{tpu_custom_call.1} parent=1 // pred_region
      %s2132 = ssub.s32 4096, 4096
      %2133 = vsyncadd [#allocation4], %s2132
      %s2134 = sshll.u32 [#allocation11], 4
      %s2135 = int_to_ptr.vmem [resolvable:$true] %s2134
      %2140 = dma.vmem_to_hbm [thread:$0]  %s2135, 4096, %s8, [#allocation4], 128, 128, 8
    $region57: #{tpu_custom_call.1} parent=1 // pred_fallthru
      _
    // Predicated region
    $region58: #{tpu_custom_call.1} parent=1 // pred_check
      _
    $region59: #{tpu_custom_call.1} parent=1 // pred_check_branch
      %2142 = sbr.rel (0) target = $region61
    $region60: #{tpu_custom_call.1} parent=1 // pred_region
      %2143 = dma.done [#allocation4], 4096
    $region61: #{tpu_custom_call.1} parent=1 // pred_fallthru
      _
    %2144 = vsyncpa [#allocation3], 1
    %2145 = vsyncpa [#allocation6], 1
    %2146 = vsyncpa [#allocation9], 1
    %2147 = vsyncpa [#allocation4], 1

</llo_original>
